<compile_context>
chip_gen: v6e
topology: v6e:2x2x1
jax: 0.10.0
libtpu: 0.0.40
codegen_flags: <defaults>
</compile_context>

<pallas_src>
import numpy as np
import jax
import jax.numpy as jnp
from jax import lax
from jax.experimental import pallas as pl
from jax.experimental.pallas import tpu as pltpu

_LANE = 128


# ----------------------------- Pallas kernels --------------------------------

def _prelu(v, alpha):
    return jnp.maximum(v, 0.0) + alpha * jnp.minimum(v, 0.0)


def _fused_kernel(x_ref, h_ref, w1_ref, b1_ref, w2_ref, b2_ref,
                  dinv_ref, binv_ref, alpha_ref, o_ref):
    """Whole layer in one shot; H (bf16, exact 0/1) is resident in VMEM."""
    alpha = alpha_ref[0]
    h = h_ref[...]                               # (Np, Np) bf16
    x = x_ref[...]                               # (Np, Fp) f32

    def hconv(z, w_ref, b_ref):
        zw = jnp.dot(z, w_ref[...], preferred_element_type=jnp.float32)
        # H^T @ zw without materializing the transpose (contract lhs axis 0 ->
        # MXU transposed-LHS feed; verified-by-construction pattern, see note
        # in the wrapper).
        e = binv_ref[...] * lax.dot_general(
            h, zw.astype(jnp.bfloat16),
            dimension_numbers=(((0,), (0,)), ((), ())),
            preferred_element_type=jnp.float32)
        return (dinv_ref[...] * jnp.dot(h, e.astype(jnp.bfloat16),
                                        preferred_element_type=jnp.float32)
                + b_ref[...])

    o1 = _prelu(hconv(x, w1_ref, b1_ref), alpha)
    o_ref[...] = _prelu(hconv(o1, w2_ref, b2_ref) + x, alpha)


def _edge_agg1_kernel(x_ref, h_ref, w1_ref, binv_ref, e1_ref):
    """Pass A: E1 = B^{-1} H^T (X @ W1), reduced over node row-tiles.

    The f32 output block is the resident accumulator (same block index for
    every grid step) - no extra VMEM scratch; binv is applied in the finalize.
    """
    i = pl.program_id(0)

    @pl.when(i == 0)
    def _init():
        e1_ref[...] = jnp.zeros_like(e1_ref)

    h = h_ref[...].astype(jnp.bfloat16)          # int8 -> bf16 upcast (exact)
    xw = jnp.dot(x_ref[...], w1_ref[...], preferred_element_type=jnp.float32)
    e1_ref[...] += lax.dot_general(
        h, xw.astype(jnp.bfloat16),
        dimension_numbers=(((0,), (0,)), ((), ())),
        preferred_element_type=jnp.float32)

    @pl.when(i == pl.num_programs(0) - 1)
    def _finalize():
        e1_ref[...] = binv_ref[...] * e1_ref[...]


def _node_then_edge_kernel(h_ref, e1_ref, dinv_ref, b1_ref, w2_ref, binv_ref,
                           alpha_ref, e2_ref):
    """Pass B: per tile O1 = PReLU(D^{-1} H E1 + b1); accumulate
    E2 = B^{-1} H^T (O1 @ W2) into the resident f32 output block."""
    i = pl.program_id(0)

    @pl.when(i == 0)
    def _init():
        e2_ref[...] = jnp.zeros_like(e2_ref)

    alpha = alpha_ref[0]
    h = h_ref[...].astype(jnp.bfloat16)          # int8 -> bf16 upcast (exact)
    o1 = dinv_ref[...] * jnp.dot(h, e1_ref[...].astype(jnp.bfloat16),
                                 preferred_element_type=jnp.float32)
    o1 = _prelu(o1 + b1_ref[...], alpha)
    x2 = jnp.dot(o1, w2_ref[...], preferred_element_type=jnp.float32)
    e2_ref[...] += lax.dot_general(
        h, x2.astype(jnp.bfloat16),
        dimension_numbers=(((0,), (0,)), ((), ())),
        preferred_element_type=jnp.float32)

    @pl.when(i == pl.num_programs(0) - 1)
    def _finalize():
        e2_ref[...] = binv_ref[...] * e2_ref[...]


def _node_out_kernel(x_ref, h_ref, e2_ref, dinv_ref, b2_ref, alpha_ref, o_ref):
    """Pass C: out = PReLU(D^{-1} H E2 + b2 + X), independent node tiles."""
    alpha = alpha_ref[0]
    h = h_ref[...].astype(jnp.bfloat16)          # int8 -> bf16 upcast (exact)
    o2 = dinv_ref[...] * jnp.dot(h, e2_ref[...].astype(jnp.bfloat16),
                                 preferred_element_type=jnp.float32)
    o2 = o2 + b2_ref[...] + x_ref[...]           # bias + residual
    o_ref[...] = _prelu(o2, alpha)


# ------------------------------- wrapper --------------------------------------

def _round_up(v, m):
    return (v + m - 1) // m * m


def _physical_vmem_bytes():
    """Per-core VMEM capacity; conservative 64 MiB (v7x) fallback."""
    try:
        info = pltpu.get_tpu_info()
        for name in ("vmem_capacity_bytes", "vmem_size_bytes", "vmem_bytes"):
            v = getattr(info, name, None)
            if v:
                return int(v)
    except Exception:
        pass
    return 64 << 20


def hypergraph_structural_layer(x, H, w1, b1, w2, b2, alpha, *,
                                max_tile_m=1024, force_tiled=False):
    """Two stacked HypergraphConv layers + PReLU + residual, on TPU via Pallas."""
    x_np = np.asarray(x, dtype=np.float32)
    H_np = np.asarray(H, dtype=np.float32)
    N, F = x_np.shape
    assert H_np.shape == (N, N), "dense incidence matrix must be (N, N)"
    Fp = _round_up(max(F, _LANE), _LANE)

    phys_vmem = _physical_vmem_bytes()
    # ~80% of physical VMEM: ~51 MiB on v7x (64 MiB/core), ~102 MiB on v5e/v6e,
    # leaving headroom for Mosaic internal scratch / double-buffering.
    budget = int(phys_vmem * 0.8)

    # D^{-1} (node degree) and B^{-1} (hyperedge degree) depend only on H;
    # computed once on the host from the UNPADDED matrix.
    deg = H_np.sum(axis=1)
    bdeg = H_np.sum(axis=0)

    def pad_inv_vec(v, Np):
        out = np.zeros((Np, 1), np.float32)
        nz = v > 0.0
        out[:N, 0][nz] = 1.0 / v[nz]
        return out

    def pad2(a, r, c, rp, cp):
        out = np.zeros((rp, cp), np.float32)
        out[:r, :c] = np.asarray(a, np.float32).reshape(r, c)
        return out

    w1p = jnp.asarray(pad2(w1, F, F, Fp, Fp))
    w2p = jnp.asarray(pad2(w2, F, F, Fp, Fp))
    b1p = jnp.asarray(pad2(b1, 1, F, 1, Fp))
    b2p = jnp.asarray(pad2(b2, 1, F, 1, Fp))
    alpha_arr = jnp.asarray(np.asarray(alpha, np.float32).reshape(1))

    smem = pl.BlockSpec(memory_space=pltpu.MemorySpace.SMEM)

    # ------------------------- fused single-kernel path -----------------------
    Np0 = _round_up(N, _LANE)
    fused_vmem_est = (4 * Np0 * Np0           # H bf16, up to 2 pipeline buffers
                      + 40 * Np0 * Fp         # x/out blocks + in-kernel temps
                      + 6 * 4 * Fp * Fp       # weights + projection temps
                      + 2 * 512 * Np0         # lane-padded (Np,1) dinv/binv
                      + (4 << 20))            # Mosaic internal scratch slack
    if (not force_tiled) and fused_vmem_est <= budget:
        Np = Np0
        Hp = np.zeros((Np, Np), np.float32)
        Hp[:N, :N] = H_np
        xp = np.zeros((Np, Fp), np.float32)
        xp[:N, :F] = x_np
        dinv = jnp.asarray(pad_inv_vec(deg, Np))
        binv = jnp.asarray(pad_inv_vec(bdeg, Np))

        def full2(shape):
            return pl.BlockSpec(shape, lambda i: (0, 0))

        out = pl.pallas_call(
            _fused_kernel,
            grid=(1,),
            in_specs=[full2((Np, Fp)),      # x
                      full2((Np, Np)),      # H (bf16, resident)
                      full2((Fp, Fp)),      # W1
                      full2((1, Fp)),       # b1
                      full2((Fp, Fp)),      # W2
                      full2((1, Fp)),       # b2
                      full2((Np, 1)),       # D^{-1}
                      full2((Np, 1)),       # B^{-1}
                      smem],                # PReLU alpha
            out_specs=full2((Np, Fp)),
            out_shape=jax.ShapeDtypeStruct((Np, Fp), jnp.float32),
            compiler_params=pltpu.CompilerParams(
                dimension_semantics=("arbitrary",),
                vmem_limit_bytes=budget),
        )(jnp.asarray(xp), jnp.asarray(Hp, dtype=jnp.bfloat16),
          w1p, b1p, w2p, b2p, dinv, binv, alpha_arr)
        return out[:N, :F]

    # ----------------------------- tiled 3-pass path --------------------------
    nbuf = 3                                  # desired H-tile pipeline depth

    def fixed_bytes(Np):
        return (2 * 4 * Np * Fp               # f32 E input block (x2 buffers)
                + 2 * 4 * Np * Fp             # f32 E output accumulator (x2)
                + 2 * Np * Fp                 # in-kernel bf16 copy of E block
                + 2 * 512 * Np                # lane-padded (Np,1) binv (x2)
                + 2 * 4 * Fp * Fp             # weights
                + (6 << 20))                  # Mosaic internal scratch slack

    def per_row_bytes(Np, nb):
        return (nb * Np                       # int8 H row tile, nb-deep
                + 2 * Np                      # in-kernel bf16 upcast of H tile
                + 2 * 4 * Fp                  # f32 x row tile (x2)
                + 2 * 4 * Fp)                 # f32 out row tile (x2)

    tm = _LANE
    for cand in (1024, 512, 256, 128):        # larger tm => fewer accumulator RMWs
        if cand > max_tile_m:
            continue
        Np_c = _round_up(N, cand)
        if fixed_bytes(Np_c) + cand * per_row_bytes(Np_c, nbuf) <= budget:
            tm = cand
            break
    while tm > _LANE and _round_up(N, tm) - N >= tm // 2:
        tm //= 2                              # avoid gross padding waste
    Np = _round_up(N, tm)
    if fixed_bytes(Np) + tm * per_row_bytes(Np, nbuf) > budget:
        nbuf = 2                              # fall back to plain double-buffering
    n_tiles = Np // tm

    # Host-side padding + storage-dtype conversion of the dominant array.
    Hb_np = np.zeros((Np, Np), np.int8)
    Hb_np[:N, :N] = H_np.astype(np.int8)
    xp_np = np.zeros((Np, Fp), np.float32)
    xp_np[:N, :F] = x_np

    Hb = jnp.asarray(Hb_np)                   # int8 in HBM, upcast in-kernel
    xp = jnp.asarray(xp_np)
    dinv = jnp.asarray(pad_inv_vec(deg, Np))
    binv = jnp.asarray(pad_inv_vec(bdeg, Np))

    def h_row_spec():
        if nbuf > 2:
            try:
                return pl.BlockSpec((tm, Np), lambda i: (i, 0),
                                    pipeline_mode=pl.Buffered(nbuf))
            except Exception:
                pass
        return pl.BlockSpec((tm, Np), lambda i: (i, 0))

    h_tile = h_row_spec()
    row_f = pl.BlockSpec((tm, Fp), lambda i: (i, 0))
    row_1 = pl.BlockSpec((tm, 1), lambda i: (i, 0))
    full_e = pl.BlockSpec((Np, Fp), lambda i: (0, 0))
    full_w = pl.BlockSpec((Fp, Fp), lambda i: (0, 0))
    full_b = pl.BlockSpec((1, Fp), lambda i: (0, 0))
    full_v = pl.BlockSpec((Np, 1), lambda i: (0, 0))

    params_arb = pltpu.CompilerParams(dimension_semantics=("arbitrary",),
                                      vmem_limit_bytes=budget)
    params_par = pltpu.CompilerParams(dimension_semantics=("parallel",),
                                      vmem_limit_bytes=budget)

    # TODO(synk): on v7x the two reduction passes (A/B) run on one TensorCore;
    # a core_map / core_parallel split with per-core partial E accumulators and
    # a small combine step would use both cores but is not implemented here.
    # NOTE: the lax.dot_general calls contract lhs axis 0 (transposed-LHS MXU
    # feed); if a bundle dump ever shows a vxpose of the H tile, switch to
    # streaming a pre-materialized H^T for the edge-aggregation matmuls.

    # ---- pass A: E1 = B^{-1} H^T (X @ W1)  (reduction over node tiles) ----
    e1 = pl.pallas_call(
        _edge_agg1_kernel,
        grid=(n_tiles,),
        in_specs=[row_f, h_tile, full_w, full_v],
        out_specs=full_e,
        out_shape=jax.ShapeDtypeStruct((Np, Fp), jnp.float32),
        compiler_params=params_arb,
    )(xp, Hb, w1p, binv)

    # ---- pass B: O1 per tile, accumulate E2 = B^{-1} H^T (O1 @ W2) ----
    e2 = pl.pallas_call(
        _node_then_edge_kernel,
        grid=(n_tiles,),
        in_specs=[h_tile, full_e, row_1, full_b, full_w, full_v, smem],
        out_specs=full_e,
        out_shape=jax.ShapeDtypeStruct((Np, Fp), jnp.float32),
        compiler_params=params_arb,
    )(Hb, e1, dinv, b1p, w2p, binv, alpha_arr)

    # ---- pass C: out = PReLU(D^{-1} H E2 + b2 + X)  (independent node tiles) ----
    out = pl.pallas_call(
        _node_out_kernel,
        grid=(n_tiles,),
        in_specs=[row_f, h_tile, full_e, row_1, full_b, smem],
        out_specs=row_f,
        out_shape=jax.ShapeDtypeStruct((Np, Fp), jnp.float32),
        compiler_params=params_par,
    )(xp, Hb, e2, dinv, b2p, alpha_arr)

    return out[:N, :F]


# ------------------- host-side hypergraph construction ----------------------

def _kmeans_labels(x, n_clusters, n_iter=25, seed=0):
    rng = np.random.RandomState(seed)
    n = x.shape[0]
    idx = rng.choice(n, size=n_clusters, replace=False)
    centroids = x[idx].copy()
    for _ in range(n_iter):
        d = ((x[:, None, :] - centroids[None, :, :]) ** 2).sum(-1)
        labels = d.argmin(1)
        for c in range(n_clusters):
            m = labels == c
            if m.any():
                centroids[c] = x[m].mean(0)
    d = ((x[:, None, :] - centroids[None, :, :]) ** 2).sum(-1)
    return d.argmin(1)


def build_hypergraph_incidence(x_np, n_clusters=5, k=5):
    """KMeans clustering + per-cluster kNN -> dense incidence matrix (N, N)."""
    x_np = np.asarray(x_np, np.float32)
    n = x_np.shape[0]
    labels = _kmeans_labels(x_np, n_clusters)
    edge_list = []
    for c in range(n_clusters):
        cluster_nodes = np.nonzero(labels == c)[0]
        if len(cluster_nodes) > 1:
            kk = min(k, len(cluster_nodes))
            feats = x_np[cluster_nodes]
            d = ((feats[:, None, :] - feats[None, :, :]) ** 2).sum(-1)
            order = np.argsort(d, axis=1, kind="stable")[:, :kk]
            for i, neighbors in enumerate(order):
                for nb in neighbors[1:]:                 # skip self (col 0)
                    edge_list.append((int(cluster_nodes[i]), int(cluster_nodes[nb])))
    H = np.zeros((n, n), dtype=np.float32)
    for node, edge in edge_list:
        H[node, edge] = 1.0                              # hyperedge ids are node indices
    return H


# ------------------------------- reference ------------------------------------

def _reference(x, H, w1, b1, w2, b2, alpha):
    """Pure-JAX f32 reference of the forward pass (tolerance check)."""
    D = jnp.sum(H, axis=1, keepdims=True)
    Dinv = jnp.where(D > 0, 1.0 / D, 0.0)
    B = jnp.sum(H, axis=0)[:, None]
    Binv = jnp.where(B > 0, 1.0 / B, 0.0)
    a = jnp.asarray(alpha, jnp.float32).reshape(())

    def prelu(v):
        return jnp.maximum(v, 0.0) + a * jnp.minimum(v, 0.0)

    def hconv(xi, w, b):
        e = Binv * (H.T @ (xi @ w))
        return Dinv * (H @ e) + b

    o1 = prelu(hconv(x, w1, b1))
    return prelu(hconv(o1, w2, b2) + x)


# --------------------------------- driver ------------------------------------

if __name__ == "__main__":
    hidden_dim = 32
    n_heads = 4        # out_channels = n_heads * hidden_dim // n_heads == hidden_dim

    key = jax.random.PRNGKey(0)
    kx, kw1, kw2, ke, kx2 = jax.random.split(key, 5)

    def glorot(k, shape):
        limit = float(np.sqrt(6.0 / (shape[0] + shape[1])))
        return jax.random.uniform(k, shape, jnp.float32, -limit, limit)

    w1 = glorot(kw1, (hidden_dim, hidden_dim))
    w2 = glorot(kw2, (hidden_dim, hidden_dim))
    b1 = jnp.zeros((1, hidden_dim), jnp.float32)
    b2 = jnp.zeros((1, hidden_dim), jnp.float32)
    alpha = jnp.array([0.25], jnp.float32)             # nn.PReLU() default

    # ---- test 1: fused single-kernel path (H resident in VMEM) ----
    N = 64
    x = jax.random.normal(kx, (N, hidden_dim), dtype=jnp.float32)
    # edge_index is accepted for API fidelity but (as in the PyTorch module)
    # only x is used to build the hypergraph.
    edge_index = jax.random.randint(ke, (2, 128), 0, N, dtype=jnp.int32)
    del edge_index

    H_np = build_hypergraph_incidence(np.asarray(x), n_clusters=5, k=5)
    out = hypergraph_structural_layer(x, H_np, w1, b1, w2, b2, alpha)
    out = jax.block_until_ready(out)
    assert out.shape == (N, hidden_dim) and out.dtype == jnp.float32
    assert bool(jnp.all(jnp.isfinite(out)))
    ref = _reference(x, jnp.asarray(H_np), w1, b1, w2, b2, alpha)
    err = float(jnp.max(jnp.abs(out - ref)))
    assert err < 5e-2, f"fused path max abs err vs f32 reference too large: {err}"

    # ---- test 2: tiled 3-pass path (multi-tile H^T reduction, int8 H stream) ----
    N2 = 256
    x2 = jax.random.normal(kx2, (N2, hidden_dim), dtype=jnp.float32)
    H2_np = build_hypergraph_incidence(np.asarray(x2), n_clusters=5, k=5)
    out2 = hypergraph_structural_layer(x2, H2_np, w1, b1, w2, b2, alpha,
                                       max_tile_m=128, force_tiled=True)
    out2 = jax.block_until_ready(out2)
    assert out2.shape == (N2, hidden_dim) and out2.dtype == jnp.float32
    assert bool(jnp.all(jnp.isfinite(out2)))
    ref2 = _reference(x2, jnp.asarray(H2_np), w1, b1, w2, b2, alpha)
    err2 = float(jnp.max(jnp.abs(out2 - ref2)))
    assert err2 < 5e-2, f"tiled path max abs err vs f32 reference too large: {err2}"

    print("KERNEL_OK")
</pallas_src>

<mosaic_0001>
module attributes {stable_mosaic.version = 11 : i64} {
  func.func @_fused_kernel(%arg0: i32, %arg1: memref<128x128xf32, #tpu.memory_space<vmem>>, %arg2: memref<128x128xbf16, #tpu.memory_space<vmem>>, %arg3: memref<128x128xf32, #tpu.memory_space<vmem>>, %arg4: memref<1x128xf32, #tpu.memory_space<vmem>>, %arg5: memref<128x128xf32, #tpu.memory_space<vmem>>, %arg6: memref<1x128xf32, #tpu.memory_space<vmem>>, %arg7: memref<128x1xf32, #tpu.memory_space<vmem>>, %arg8: memref<128x1xf32, #tpu.memory_space<vmem>>, %arg9: memref<1xf32, #tpu.memory_space<smem>>, %arg10: memref<128x128xf32, #tpu.memory_space<vmem>>) attributes {dimension_semantics = [#tpu.dimension_semantics<arbitrary>], iteration_bounds = array<i64: 1>, scalar_prefetch = 0 : i64, scratch_operands = 0 : i64, tpu.core_type = #tpu.core_type<tc>, window_params = [{pipeline_mode = #tpu.pipeline_mode<synchronous>, transform_indices = @transform_0, window_bounds = array<i64: 128, 128>}, {pipeline_mode = #tpu.pipeline_mode<synchronous>, transform_indices = @transform_1, window_bounds = array<i64: 128, 128>}, {pipeline_mode = #tpu.pipeline_mode<synchronous>, transform_indices = @transform_2, window_bounds = array<i64: 128, 128>}, {pipeline_mode = #tpu.pipeline_mode<synchronous>, transform_indices = @transform_3, window_bounds = array<i64: 1, 128>}, {pipeline_mode = #tpu.pipeline_mode<synchronous>, transform_indices = @transform_4, window_bounds = array<i64: 128, 128>}, {pipeline_mode = #tpu.pipeline_mode<synchronous>, transform_indices = @transform_5, window_bounds = array<i64: 1, 128>}, {pipeline_mode = #tpu.pipeline_mode<synchronous>, transform_indices = @transform_6, window_bounds = array<i64: 128, 1>}, {pipeline_mode = #tpu.pipeline_mode<synchronous>, transform_indices = @transform_7, window_bounds = array<i64: 128, 1>}, {transform_indices = @transform_8, window_bounds = array<i64: 1>}, {pipeline_mode = #tpu.pipeline_mode<synchronous>, transform_indices = @transform_9, window_bounds = array<i64: 128, 128>}]} {
    %c0 = arith.constant 0 : index
    %0 = memref.load %arg9[%c0] : memref<1xf32, #tpu.memory_space<smem>>
    %c0_0 = arith.constant 0 : index
    %c0_1 = arith.constant 0 : index
    %1 = vector.load %arg2[%c0_0, %c0_1] : memref<128x128xbf16, #tpu.memory_space<vmem>>, vector<128x128xbf16>
    %c0_2 = arith.constant 0 : index
    %c0_3 = arith.constant 0 : index
    %2 = vector.load %arg1[%c0_2, %c0_3] : memref<128x128xf32, #tpu.memory_space<vmem>>, vector<128x128xf32>
    %c0_4 = arith.constant 0 : index
    %c0_5 = arith.constant 0 : index
    %3 = vector.load %arg3[%c0_4, %c0_5] : memref<128x128xf32, #tpu.memory_space<vmem>>, vector<128x128xf32>
    %cst = arith.constant dense<0.000000e+00> : vector<128x128xf32>
    %4 = tpu.matmul %2, %3, %cst {dimension_numbers = #tpu.dot_dimension_numbers<[1], [0], [0], [1], [0, 0, 1, 1], [], []>} : vector<128x128xf32>, vector<128x128xf32>, vector<128x128xf32> -> vector<128x128xf32>
    %c0_6 = arith.constant 0 : index
    %c0_7 = arith.constant 0 : index
    %5 = vector.load %arg8[%c0_6, %c0_7] : memref<128x1xf32, #tpu.memory_space<vmem>>, vector<128x1xf32>
    %6 = arith.truncf %4 : vector<128x128xf32> to vector<128x128xbf16>
    %cst_8 = arith.constant dense<0.000000e+00> : vector<128x128xf32>
    %7 = tpu.matmul %1, %6, %cst_8 {dimension_numbers = #tpu.dot_dimension_numbers<[0], [0], [1], [1], [0, 1, 1, 1], [], []>} : vector<128x128xbf16>, vector<128x128xbf16>, vector<128x128xf32> -> vector<128x128xf32>
    %8 = vector.broadcast %5 : vector<128x1xf32> to vector<128x128xf32>
    %9 = arith.mulf %8, %7 : vector<128x128xf32>
    %c0_9 = arith.constant 0 : index
    %c0_10 = arith.constant 0 : index
    %10 = vector.load %arg7[%c0_9, %c0_10] : memref<128x1xf32, #tpu.memory_space<vmem>>, vector<128x1xf32>
    %11 = arith.truncf %9 : vector<128x128xf32> to vector<128x128xbf16>
    %cst_11 = arith.constant dense<0.000000e+00> : vector<128x128xf32>
    %12 = tpu.matmul %1, %11, %cst_11 {dimension_numbers = #tpu.dot_dimension_numbers<[1], [0], [0], [1], [0, 0, 1, 1], [], []>} : vector<128x128xbf16>, vector<128x128xbf16>, vector<128x128xf32> -> vector<128x128xf32>
    %13 = vector.broadcast %10 : vector<128x1xf32> to vector<128x128xf32>
    %14 = arith.mulf %13, %12 : vector<128x128xf32>
    %c0_12 = arith.constant 0 : index
    %c0_13 = arith.constant 0 : index
    %15 = vector.load %arg4[%c0_12, %c0_13] : memref<1x128xf32, #tpu.memory_space<vmem>>, vector<1x128xf32>
    %16 = vector.broadcast %15 : vector<1x128xf32> to vector<128x128xf32>
    %17 = arith.addf %14, %16 : vector<128x128xf32>
    %cst_14 = arith.constant 0.000000e+00 : f32
    %18 = vector.broadcast %cst_14 : f32 to vector<128x128xf32>
    %19 = arith.maximumf %17, %18 : vector<128x128xf32>
    %cst_15 = arith.constant 0.000000e+00 : f32
    %20 = vector.broadcast %cst_15 : f32 to vector<128x128xf32>
    %21 = arith.minimumf %17, %20 : vector<128x128xf32>
    %22 = vector.broadcast %0 : f32 to vector<128x128xf32>
    %23 = arith.mulf %22, %21 : vector<128x128xf32>
    %24 = arith.addf %19, %23 : vector<128x128xf32>
    %c0_16 = arith.constant 0 : index
    %c0_17 = arith.constant 0 : index
    %25 = vector.load %arg5[%c0_16, %c0_17] : memref<128x128xf32, #tpu.memory_space<vmem>>, vector<128x128xf32>
    %cst_18 = arith.constant dense<0.000000e+00> : vector<128x128xf32>
    %26 = tpu.matmul %24, %25, %cst_18 {dimension_numbers = #tpu.dot_dimension_numbers<[1], [0], [0], [1], [0, 0, 1, 1], [], []>} : vector<128x128xf32>, vector<128x128xf32>, vector<128x128xf32> -> vector<128x128xf32>
    %c0_19 = arith.constant 0 : index
    %c0_20 = arith.constant 0 : index
    %27 = vector.load %arg8[%c0_19, %c0_20] : memref<128x1xf32, #tpu.memory_space<vmem>>, vector<128x1xf32>
    %28 = arith.truncf %26 : vector<128x128xf32> to vector<128x128xbf16>
    %cst_21 = arith.constant dense<0.000000e+00> : vector<128x128xf32>
    %29 = tpu.matmul %1, %28, %cst_21 {dimension_numbers = #tpu.dot_dimension_numbers<[0], [0], [1], [1], [0, 1, 1, 1], [], []>} : vector<128x128xbf16>, vector<128x128xbf16>, vector<128x128xf32> -> vector<128x128xf32>
    %30 = vector.broadcast %27 : vector<128x1xf32> to vector<128x128xf32>
    %31 = arith.mulf %30, %29 : vector<128x128xf32>
    %c0_22 = arith.constant 0 : index
    %c0_23 = arith.constant 0 : index
    %32 = vector.load %arg7[%c0_22, %c0_23] : memref<128x1xf32, #tpu.memory_space<vmem>>, vector<128x1xf32>
    %33 = arith.truncf %31 : vector<128x128xf32> to vector<128x128xbf16>
    %cst_24 = arith.constant dense<0.000000e+00> : vector<128x128xf32>
    %34 = tpu.matmul %1, %33, %cst_24 {dimension_numbers = #tpu.dot_dimension_numbers<[1], [0], [0], [1], [0, 0, 1, 1], [], []>} : vector<128x128xbf16>, vector<128x128xbf16>, vector<128x128xf32> -> vector<128x128xf32>
    %35 = vector.broadcast %32 : vector<128x1xf32> to vector<128x128xf32>
    %36 = arith.mulf %35, %34 : vector<128x128xf32>
    %c0_25 = arith.constant 0 : index
    %c0_26 = arith.constant 0 : index
    %37 = vector.load %arg6[%c0_25, %c0_26] : memref<1x128xf32, #tpu.memory_space<vmem>>, vector<1x128xf32>
    %38 = vector.broadcast %37 : vector<1x128xf32> to vector<128x128xf32>
    %39 = arith.addf %36, %38 : vector<128x128xf32>
    %40 = arith.addf %39, %2 : vector<128x128xf32>
    %cst_27 = arith.constant 0.000000e+00 : f32
    %41 = vector.broadcast %cst_27 : f32 to vector<128x128xf32>
    %42 = arith.maximumf %40, %41 : vector<128x128xf32>
    %cst_28 = arith.constant 0.000000e+00 : f32
    %43 = vector.broadcast %cst_28 : f32 to vector<128x128xf32>
    %44 = arith.minimumf %40, %43 : vector<128x128xf32>
    %45 = vector.broadcast %0 : f32 to vector<128x128xf32>
    %46 = arith.mulf %45, %44 : vector<128x128xf32>
    %47 = arith.addf %42, %46 : vector<128x128xf32>
    %c0_29 = arith.constant 0 : index
    %c0_30 = arith.constant 0 : index
    %48 = vector.load %arg10[%c0_29, %c0_30] : memref<128x128xf32, #tpu.memory_space<vmem>>, vector<128x128xf32>
    tpu.vector_store %arg10[%c0_29, %c0_30], %47 {strides = array<i32>} : memref<128x128xf32, #tpu.memory_space<vmem>>, vector<128x128xf32>,
    return
  }
  func.func @transform_0(%arg0: i32) -> (i32, i32) {
    %c0_i32 = arith.constant 0 : i32
    %c0_i32_0 = arith.constant 0 : i32
    %c0_i32_1 = arith.constant 0 : i32
    return %c0_i32, %c0_i32_0 : i32, i32
  }
  func.func @transform_1(%arg0: i32) -> (i32, i32) {
    %c0_i32 = arith.constant 0 : i32
    %c0_i32_0 = arith.constant 0 : i32
    %c0_i32_1 = arith.constant 0 : i32
    return %c0_i32, %c0_i32_0 : i32, i32
  }
  func.func @transform_2(%arg0: i32) -> (i32, i32) {
    %c0_i32 = arith.constant 0 : i32
    %c0_i32_0 = arith.constant 0 : i32
    %c0_i32_1 = arith.constant 0 : i32
    return %c0_i32, %c0_i32_0 : i32, i32
  }
  func.func @transform_3(%arg0: i32) -> (i32, i32) {
    %c0_i32 = arith.constant 0 : i32
    %c0_i32_0 = arith.constant 0 : i32
    %c0_i32_1 = arith.constant 0 : i32
    return %c0_i32, %c0_i32_0 : i32, i32
  }
  func.func @transform_4(%arg0: i32) -> (i32, i32) {
    %c0_i32 = arith.constant 0 : i32
    %c0_i32_0 = arith.constant 0 : i32
    %c0_i32_1 = arith.constant 0 : i32
    return %c0_i32, %c0_i32_0 : i32, i32
  }
  func.func @transform_5(%arg0: i32) -> (i32, i32) {
    %c0_i32 = arith.constant 0 : i32
    %c0_i32_0 = arith.constant 0 : i32
    %c0_i32_1 = arith.constant 0 : i32
    return %c0_i32, %c0_i32_0 : i32, i32
  }
  func.func @transform_6(%arg0: i32) -> (i32, i32) {
    %c0_i32 = arith.constant 0 : i32
    %c0_i32_0 = arith.constant 0 : i32
    %c0_i32_1 = arith.constant 0 : i32
    return %c0_i32, %c0_i32_0 : i32, i32
  }
  func.func @transform_7(%arg0: i32) -> (i32, i32) {
    %c0_i32 = arith.constant 0 : i32
    %c0_i32_0 = arith.constant 0 : i32
    %c0_i32_1 = arith.constant 0 : i32
    return %c0_i32, %c0_i32_0 : i32, i32
  }
  func.func @transform_8(%arg0: i32) -> i32 {
    %c0_i32 = arith.constant 0 : i32
    %c0_i32_0 = arith.constant 0 : i32
    return %c0_i32 : i32
  }
  func.func @transform_9(%arg0: i32) -> (i32, i32) {
    %c0_i32 = arith.constant 0 : i32
    %c0_i32_0 = arith.constant 0 : i32
    %c0_i32_1 = arith.constant 0 : i32
    return %c0_i32, %c0_i32_0 : i32, i32
  }
}

</mosaic_0001>

<llo_original>
// kernel: tpu_custom_call.1
$region0: #{tpu_custom_call.1}
  #allocation0 [shape = 'u32[]', space=smem, size = 0x4, offset = 0x4, fixed_abs, tag = 'smem constant byte address 0x4 - core index']
  #allocation1 [shape = 'u32[144,128]{1,0:T(1,128)}', space=vmem, size = 0x12000, scoped, tag = 'internal scratch']
  #allocation2 [shape = 'f32[1]{0:T(128)S(6)}', space=smem, size = 0x200, scoped, tag = 'scoped memory for tpu_custom_call.1']
  %s0 = inlined_call_operand.vmem [shape: f32[128,128], index: 0, kind: input, shape index: {}]
  %s1 = inlined_call_operand.hbm [shape: bf16[128,128], index: 1, kind: input, shape index: {}]
  %s2 = inlined_call_operand.vmem [shape: f32[128,128], index: 2, kind: input, shape index: {}]
  %s3 = inlined_call_operand.vmem [shape: f32[1,128], index: 3, kind: input, shape index: {}]
  %s4 = inlined_call_operand.hbm [shape: f32[128,128], index: 4, kind: input, shape index: {}]
  %s5 = inlined_call_operand.vmem [shape: f32[1,128], index: 5, kind: input, shape index: {}]
  %s6 = inlined_call_operand.vmem [shape: f32[128,1], index: 6, kind: input, shape index: {}]
  %s7 = inlined_call_operand.vmem [shape: f32[128,1], index: 7, kind: input, shape index: {}]
  %s8 = inlined_call_operand.<no memory space> [shape: f32[1], index: 8, kind: input, shape index: {}]
  %s9 = inlined_call_operand.hbm [shape: f32[128,128], index: 9, kind: output, shape index: {}]
  %s10 = sld [smem:[#allocation0]]
  $region54: #{tpu_custom_call.1} parent=0
    _
  %s12 = ssub.s32 1, %s10
  %s13 = scalar_select 0, %s12, %s10
  %14 = sst [smem:[#allocation2]] %s8
  $region1: #{tpu_custom_call.1} parent=0
    #allocation3 [shape = 'u8[32768]{0}', space=vmem, size = 0x8000, scoped, tag = 'input window, operand 1, single buffered']
    #allocation4 [shape = 's32[1]{0}', space=sflag, size = 0x4, scoped, tag = 'scoped memory for tpu_custom_call.1']
    #allocation5 [shape = 's32[1]{0}', space=sflag, size = 0x4, scoped, tag = 'scoped memory for tpu_custom_call.1']
    #allocation6 [shape = 'u8[65536]{0}', space=vmem, size = 0x10000, scoped, tag = 'input window, operand 4, single buffered']
    #allocation7 [shape = 's32[1]{0}', space=sflag, size = 0x4, scoped, tag = 'scoped memory for tpu_custom_call.1']
    #allocation8 [shape = 'u8[65536]{0}', space=vmem, size = 0x10000, scoped, tag = 'output window, operand 0, single buffered']
    %15 = vsyncpa [#allocation4], 0
    %16 = vsyncpa [#allocation7], 0
    %17 = vsyncpa [#allocation5], 0
    // Predicated region
    $region2: #{tpu_custom_call.1} parent=1 // pred_check
      _
    $region3: #{tpu_custom_call.1} parent=1 // pred_check_branch
      %19 = sbr.rel (0) target = $region5
    $region4: #{tpu_custom_call.1} parent=1 // pred_region
      _
    $region5: #{tpu_custom_call.1} parent=1 // pred_fallthru
      _
    // Predicated region
    $region6: #{tpu_custom_call.1} parent=1 // pred_check
      _
    $region7: #{tpu_custom_call.1} parent=1 // pred_check_branch
      %21 = sbr.rel (0) target = $region9
    $region8: #{tpu_custom_call.1} parent=1 // pred_region
      %s23 = ssub.s32 1024, 1024
      %24 = vsyncadd [#allocation4], %s23
      %s25 = sshll.u32 [#allocation3], 4
      %s26 = int_to_ptr.vmem [resolvable:$true] %s25
      %31 = dma.hbm_to_vmem [thread:$0]  %s1, 1024, %s26, [#allocation4], 64, 64, 4
    $region9: #{tpu_custom_call.1} parent=1 // pred_fallthru
      _
    // Predicated region
    $region10: #{tpu_custom_call.1} parent=1 // pred_check
      _
    $region11: #{tpu_custom_call.1} parent=1 // pred_check_branch
      %33 = sbr.rel (0) target = $region13
    $region12: #{tpu_custom_call.1} parent=1 // pred_region
      _
    $region13: #{tpu_custom_call.1} parent=1 // pred_fallthru
      _
    // Predicated region
    $region14: #{tpu_custom_call.1} parent=1 // pred_check
      _
    $region15: #{tpu_custom_call.1} parent=1 // pred_check_branch
      %35 = sbr.rel (0) target = $region17
    $region16: #{tpu_custom_call.1} parent=1 // pred_region
      _
    $region17: #{tpu_custom_call.1} parent=1 // pred_fallthru
      _
    // Predicated region
    $region18: #{tpu_custom_call.1} parent=1 // pred_check
      _
    $region19: #{tpu_custom_call.1} parent=1 // pred_check_branch
      %37 = sbr.rel (0) target = $region21
    $region20: #{tpu_custom_call.1} parent=1 // pred_region
      %s39 = ssub.s32 2048, 2048
      %40 = vsyncadd [#allocation7], %s39
      %s41 = sshll.u32 [#allocation6], 4
      %s42 = int_to_ptr.vmem [resolvable:$true] %s41
      %47 = dma.hbm_to_vmem [thread:$0]  %s4, 2048, %s42, [#allocation7], 128, 128, 8
    $region21: #{tpu_custom_call.1} parent=1 // pred_fallthru
      _
    // Predicated region
    $region22: #{tpu_custom_call.1} parent=1 // pred_check
      _
    $region23: #{tpu_custom_call.1} parent=1 // pred_check_branch
      %49 = sbr.rel (0) target = $region25
    $region24: #{tpu_custom_call.1} parent=1 // pred_region
      _
    $region25: #{tpu_custom_call.1} parent=1 // pred_fallthru
      _
    // Predicated region
    $region26: #{tpu_custom_call.1} parent=1 // pred_check
      _
    $region27: #{tpu_custom_call.1} parent=1 // pred_check_branch
      %51 = sbr.rel (0) target = $region29
    $region28: #{tpu_custom_call.1} parent=1 // pred_region
      _
    $region29: #{tpu_custom_call.1} parent=1 // pred_fallthru
      _
    // Predicated region
    $region30: #{tpu_custom_call.1} parent=1 // pred_check
      _
    $region31: #{tpu_custom_call.1} parent=1 // pred_check_branch
      %53 = sbr.rel (0) target = $region33
    $region32: #{tpu_custom_call.1} parent=1 // pred_region
      _
    $region33: #{tpu_custom_call.1} parent=1 // pred_fallthru
      _
    // Predicated region
    $region34: #{tpu_custom_call.1} parent=1 // pred_check
      _
    $region35: #{tpu_custom_call.1} parent=1 // pred_check_branch
      %55 = sbr.rel (0) target = $region37
    $region36: #{tpu_custom_call.1} parent=1 // pred_region
      _
    $region37: #{tpu_custom_call.1} parent=1 // pred_fallthru
      _
    // Predicated region
    $region38: #{tpu_custom_call.1} parent=1 // pred_check
      _
    $region39: #{tpu_custom_call.1} parent=1 // pred_check_branch
      %57 = sbr.rel (0) target = $region41
    $region40: #{tpu_custom_call.1} parent=1 // pred_region
      %58 = dma.done [#allocation4], 1024
    $region41: #{tpu_custom_call.1} parent=1 // pred_fallthru
      _
    // Predicated region
    $region42: #{tpu_custom_call.1} parent=1 // pred_check
      _
    $region43: #{tpu_custom_call.1} parent=1 // pred_check_branch
      %60 = sbr.rel (0) target = $region45
    $region44: #{tpu_custom_call.1} parent=1 // pred_region
      %61 = dma.done [#allocation7], 2048
    $region45: #{tpu_custom_call.1} parent=1 // pred_fallthru
      _
    %s63 = sld [smem:[#allocation2]]
    %v64 = vld [vmem:[#allocation3] sm:$0xf]
    %v65 = vld [vmem:[#allocation3 + $0x4] sm:$0xf]
    %v66 = vld [vmem:[#allocation3 + $0x8] sm:$0xf]
    %v67 = vld [vmem:[#allocation3 + $0xc] sm:$0xf]
    %v68 = vld [vmem:[#allocation3 + $0x10] sm:$0xf]
    %v69 = vld [vmem:[#allocation3 + $0x14] sm:$0xf]
    %v70 = vld [vmem:[#allocation3 + $0x18] sm:$0xf]
    %v71 = vld [vmem:[#allocation3 + $0x1c] sm:$0xf]
    %v72 = vld [vmem:[#allocation3 + $0x20] sm:$0xf]
    %v73 = vld [vmem:[#allocation3 + $0x24] sm:$0xf]
    %v74 = vld [vmem:[#allocation3 + $0x28] sm:$0xf]
    %v75 = vld [vmem:[#allocation3 + $0x2c] sm:$0xf]
    %v76 = vld [vmem:[#allocation3 + $0x30] sm:$0xf]
    %v77 = vld [vmem:[#allocation3 + $0x34] sm:$0xf]
    %v78 = vld [vmem:[#allocation3 + $0x38] sm:$0xf]
    %v79 = vld [vmem:[#allocation3 + $0x3c] sm:$0xf]
    %v80 = vld [vmem:[%s0] sm:$0xff]
    %v81 = vld [vmem:[%s0 + $0x8] sm:$0xff]
    %v82 = vld [vmem:[%s0 + $0x10] sm:$0xff]
    %v83 = vld [vmem:[%s0 + $0x18] sm:$0xff]
    %v84 = vld [vmem:[%s0 + $0x20] sm:$0xff]
    %v85 = vld [vmem:[%s0 + $0x28] sm:$0xff]
    %v86 = vld [vmem:[%s0 + $0x30] sm:$0xff]
    %v87 = vld [vmem:[%s0 + $0x38] sm:$0xff]
    %v88 = vld [vmem:[%s0 + $0x40] sm:$0xff]
    %v89 = vld [vmem:[%s0 + $0x48] sm:$0xff]
    %v90 = vld [vmem:[%s0 + $0x50] sm:$0xff]
    %v91 = vld [vmem:[%s0 + $0x58] sm:$0xff]
    %v92 = vld [vmem:[%s0 + $0x60] sm:$0xff]
    %v93 = vld [vmem:[%s0 + $0x68] sm:$0xff]
    %v94 = vld [vmem:[%s0 + $0x70] sm:$0xff]
    %v95 = vld [vmem:[%s0 + $0x78] sm:$0xff]
    %v96 = vld [vmem:[%s2] sm:$0xff]
    %v97 = vld [vmem:[%s2 + $0x8] sm:$0xff]
    %v98 = vld [vmem:[%s2 + $0x10] sm:$0xff]
    %v99 = vld [vmem:[%s2 + $0x18] sm:$0xff]
    %v100 = vld [vmem:[%s2 + $0x20] sm:$0xff]
    %v101 = vld [vmem:[%s2 + $0x28] sm:$0xff]
    %v102 = vld [vmem:[%s2 + $0x30] sm:$0xff]
    %v103 = vld [vmem:[%s2 + $0x38] sm:$0xff]
    %v104 = vld [vmem:[%s2 + $0x40] sm:$0xff]
    %v105 = vld [vmem:[%s2 + $0x48] sm:$0xff]
    %v106 = vld [vmem:[%s2 + $0x50] sm:$0xff]
    %v107 = vld [vmem:[%s2 + $0x58] sm:$0xff]
    %v108 = vld [vmem:[%s2 + $0x60] sm:$0xff]
    %v109 = vld [vmem:[%s2 + $0x68] sm:$0xff]
    %v110 = vld [vmem:[%s2 + $0x70] sm:$0xff]
    %v111 = vld [vmem:[%s2 + $0x78] sm:$0xff]
    %112 = vmatprep.subr.mxu0 0.0
    %113 = vmatpush1.msra.mxu0 %v111
    %114 = vmatprep.subr.mxu0 0.0
    %115 = vmatpush1.msra.mxu0 %v110
    %116 = vmatprep.subr.mxu0 0.0
    %117 = vmatpush1.msra.mxu0 %v109
    %118 = vmatprep.subr.mxu0 0.0
    %119 = vmatpush1.msra.mxu0 %v108
    %120 = vmatprep.subr.mxu0 0.0
    %121 = vmatpush1.msra.mxu0 %v107
    %122 = vmatprep.subr.mxu0 0.0
    %123 = vmatpush1.msra.mxu0 %v106
    %124 = vmatprep.subr.mxu0 0.0
    %125 = vmatpush1.msra.mxu0 %v105
    %126 = vmatprep.subr.mxu0 0.0
    %127 = vmatpush1.msra.mxu0 %v104
    %128 = vmatprep.subr.mxu0 0.0
    %129 = vmatpush1.msra.mxu0 %v103
    %130 = vmatprep.subr.mxu0 0.0
    %131 = vmatpush1.msra.mxu0 %v102
    %132 = vmatprep.subr.mxu0 0.0
    %133 = vmatpush1.msra.mxu0 %v101
    %134 = vmatprep.subr.mxu0 0.0
    %135 = vmatpush1.msra.mxu0 %v100
    %136 = vmatprep.subr.mxu0 0.0
    %137 = vmatpush1.msra.mxu0 %v99
    %138 = vmatprep.subr.mxu0 0.0
    %139 = vmatpush1.msra.mxu0 %v98
    %140 = vmatprep.subr.mxu0 0.0
    %141 = vmatpush1.msra.mxu0 %v97
    %142 = vmatprep.subr.mxu0 0.0
    %143 = vmatpush1.msra.mxu0 %v96
    %144 = vmatprep.subr.mxu0 0.0
    %145 = vmatpush2.msra.mxu0 0.0
    %146 = vmatprep.subr.mxu0 0.0
    %147 = vmatpush2.msra.mxu0 0.0
    %148 = vmatprep.subr.mxu0 0.0
    %149 = vmatpush2.msra.mxu0 0.0
    %150 = vmatprep.subr.mxu0 0.0
    %151 = vmatpush2.msra.mxu0 0.0
    %152 = vmatprep.subr.mxu0 0.0
    %153 = vmatpush2.msra.mxu0 0.0
    %154 = vmatprep.subr.mxu0 0.0
    %155 = vmatpush2.msra.mxu0 0.0
    %156 = vmatprep.subr.mxu0 0.0
    %157 = vmatpush2.msra.mxu0 0.0
    %158 = vmatprep.subr.mxu0 0.0
    %159 = vmatpush2.msra.mxu0 0.0
    %160 = vmatprep.subr.mxu0 0.0
    %161 = vmatpush2.msra.mxu0 0.0
    %162 = vmatprep.subr.mxu0 0.0
    %163 = vmatpush2.msra.mxu0 0.0
    %164 = vmatprep.subr.mxu0 0.0
    %165 = vmatpush2.msra.mxu0 0.0
    %166 = vmatprep.subr.mxu0 0.0
    %167 = vmatpush2.msra.mxu0 0.0
    %168 = vmatprep.subr.mxu0 0.0
    %169 = vmatpush2.msra.mxu0 0.0
    %170 = vmatprep.subr.mxu0 0.0
    %171 = vmatpush2.msra.mxu0 0.0
    %172 = vmatprep.subr.mxu0 0.0
    %173 = vmatpush2.msra.mxu0 0.0
    %174 = vmatprep.subr.mxu0 0.0
    %175 = vmatpush2.msra.mxu0 0.0
    %176 = vmatprep.mubr.f32.mxu0 0.0
    %177 = vmatmul.mubr.f32.gmra.mxu0 %v80
    %v178 = vpop.f32.mrf.mxu0
    %v179 = vadd.f32 0.0, %v178
    %v180 = vpop.f32.mrf.mxu0
    %181 = vmatprep.mubr.f32.mxu0 0.0
    %182 = vmatmul.mubr.f32.gmra.mxu0 %v81
    %v183 = vpop.f32.mrf.mxu0
    %v184 = vadd.f32 0.0, %v183
    %v185 = vpop.f32.mrf.mxu0
    %186 = vmatprep.mubr.f32.mxu0 0.0
    %187 = vmatmul.mubr.f32.gmra.mxu0 %v82
    %v188 = vpop.f32.mrf.mxu0
    %v189 = vadd.f32 0.0, %v188
    %v190 = vpop.f32.mrf.mxu0
    %191 = vmatprep.mubr.f32.mxu0 0.0
    %192 = vmatmul.mubr.f32.gmra.mxu0 %v83
    %v193 = vpop.f32.mrf.mxu0
    %v194 = vadd.f32 0.0, %v193
    %v195 = vpop.f32.mrf.mxu0
    %196 = vmatprep.mubr.f32.mxu0 0.0
    %197 = vmatmul.mubr.f32.gmra.mxu0 %v84
    %v198 = vpop.f32.mrf.mxu0
    %v199 = vadd.f32 0.0, %v198
    %v200 = vpop.f32.mrf.mxu0
    %201 = vmatprep.mubr.f32.mxu0 0.0
    %202 = vmatmul.mubr.f32.gmra.mxu0 %v85
    %v203 = vpop.f32.mrf.mxu0
    %v204 = vadd.f32 0.0, %v203
    %v205 = vpop.f32.mrf.mxu0
    %206 = vmatprep.mubr.f32.mxu0 0.0
    %207 = vmatmul.mubr.f32.gmra.mxu0 %v86
    %v208 = vpop.f32.mrf.mxu0
    %v209 = vadd.f32 0.0, %v208
    %v210 = vpop.f32.mrf.mxu0
    %211 = vmatprep.mubr.f32.mxu0 0.0
    %212 = vmatmul.mubr.f32.gmra.mxu0 %v87
    %v213 = vpop.f32.mrf.mxu0
    %v214 = vadd.f32 0.0, %v213
    %v215 = vpop.f32.mrf.mxu0
    %216 = vmatprep.mubr.f32.mxu0 0.0
    %217 = vmatmul.mubr.f32.gmra.mxu0 %v88
    %v218 = vpop.f32.mrf.mxu0
    %v219 = vadd.f32 0.0, %v218
    %v220 = vpop.f32.mrf.mxu0
    %221 = vmatprep.mubr.f32.mxu0 0.0
    %222 = vmatmul.mubr.f32.gmra.mxu0 %v89
    %v223 = vpop.f32.mrf.mxu0
    %v224 = vadd.f32 0.0, %v223
    %v225 = vpop.f32.mrf.mxu0
    %226 = vmatprep.mubr.f32.mxu0 0.0
    %227 = vmatmul.mubr.f32.gmra.mxu0 %v90
    %v228 = vpop.f32.mrf.mxu0
    %v229 = vadd.f32 0.0, %v228
    %v230 = vpop.f32.mrf.mxu0
    %231 = vmatprep.mubr.f32.mxu0 0.0
    %232 = vmatmul.mubr.f32.gmra.mxu0 %v91
    %v233 = vpop.f32.mrf.mxu0
    %v234 = vadd.f32 0.0, %v233
    %v235 = vpop.f32.mrf.mxu0
    %236 = vmatprep.mubr.f32.mxu0 0.0
    %237 = vmatmul.mubr.f32.gmra.mxu0 %v92
    %v238 = vpop.f32.mrf.mxu0
    %v239 = vadd.f32 0.0, %v238
    %v240 = vpop.f32.mrf.mxu0
    %241 = vmatprep.mubr.f32.mxu0 0.0
    %242 = vmatmul.mubr.f32.gmra.mxu0 %v93
    %v243 = vpop.f32.mrf.mxu0
    %v244 = vadd.f32 0.0, %v243
    %v245 = vpop.f32.mrf.mxu0
    %246 = vmatprep.mubr.f32.mxu0 0.0
    %247 = vmatmul.mubr.f32.gmra.mxu0 %v94
    %v248 = vpop.f32.mrf.mxu0
    %v249 = vadd.f32 0.0, %v248
    %v250 = vpop.f32.mrf.mxu0
    %251 = vmatprep.mubr.f32.mxu0 0.0
    %252 = vmatmul.mubr.f32.gmra.mxu0 %v95
    %v253 = vpop.f32.mrf.mxu0
    %v254 = vadd.f32 0.0, %v253
    %v255 = vpop.f32.mrf.mxu0
    %256 = vdwg.mxu0
    %v257 = vld [vmem:[%s7] sm:$0xff]
    %v258 = vld [vmem:[%s7 + $0x8] sm:$0xff]
    %v259 = vld [vmem:[%s7 + $0x10] sm:$0xff]
    %v260 = vld [vmem:[%s7 + $0x18] sm:$0xff]
    %v261 = vld [vmem:[%s7 + $0x20] sm:$0xff]
    %v262 = vld [vmem:[%s7 + $0x28] sm:$0xff]
    %v263 = vld [vmem:[%s7 + $0x30] sm:$0xff]
    %v264 = vld [vmem:[%s7 + $0x38] sm:$0xff]
    %v265 = vld [vmem:[%s7 + $0x40] sm:$0xff]
    %v266 = vld [vmem:[%s7 + $0x48] sm:$0xff]
    %v267 = vld [vmem:[%s7 + $0x50] sm:$0xff]
    %v268 = vld [vmem:[%s7 + $0x58] sm:$0xff]
    %v269 = vld [vmem:[%s7 + $0x60] sm:$0xff]
    %v270 = vld [vmem:[%s7 + $0x68] sm:$0xff]
    %v271 = vld [vmem:[%s7 + $0x70] sm:$0xff]
    %v272 = vld [vmem:[%s7 + $0x78] sm:$0xff]
    %v273 = vpack.c.bf16 %v184, %v179
    %v274 = vpack.c.bf16 %v194, %v189
    %v275 = vpack.c.bf16 %v204, %v199
    %v276 = vpack.c.bf16 %v214, %v209
    %v277 = vpack.c.bf16 %v224, %v219
    %v278 = vpack.c.bf16 %v234, %v229
    %v279 = vpack.c.bf16 %v244, %v239
    %v280 = vpack.c.bf16 %v254, %v249
    %v297 = vunpack.c.l.b16 %v64
    %v298 = vunpack.c.l.b16 %v65
    %v299 = vunpack.c.l.b16 %v66
    %v300 = vunpack.c.l.b16 %v67
    %v301 = vunpack.c.l.b16 %v68
    %v302 = vunpack.c.l.b16 %v69
    %v303 = vunpack.c.l.b16 %v70
    %v304 = vunpack.c.l.b16 %v71
    %v305 = vunpack.c.l.b16 %v72
    %v306 = vunpack.c.l.b16 %v73
    %v307 = vunpack.c.l.b16 %v74
    %v308 = vunpack.c.l.b16 %v75
    %v309 = vunpack.c.l.b16 %v76
    %v310 = vunpack.c.l.b16 %v77
    %v311 = vunpack.c.l.b16 %v78
    %v312 = vunpack.c.l.b16 %v79
    %v313 = vpack.c.b16 %v298, %v297
    %v314 = vpack.c.b16 %v300, %v299
    %v315 = vpack.c.b16 %v302, %v301
    %v316 = vpack.c.b16 %v304, %v303
    %v317 = vpack.c.b16 %v306, %v305
    %v318 = vpack.c.b16 %v308, %v307
    %v319 = vpack.c.b16 %v310, %v309
    %v320 = vpack.c.b16 %v312, %v311
    %329 = vxpose.xlu0.c.b16.start [1/8] %v313, 128
    %330 = vxpose.xlu0.c.b16.cont [2/8] %v314, 128
    %331 = vxpose.xlu0.c.b16.cont [3/8] %v315, 128
    %332 = vxpose.xlu0.c.b16.cont [4/8] %v316, 128
    %333 = vxpose.xlu0.c.b16.cont [5/8] %v317, 128
    %334 = vxpose.xlu0.c.b16.cont [6/8] %v318, 128
    %335 = vxpose.xlu0.c.b16.cont [7/8] %v319, 128
    %336 = vxpose.xlu0.c.b16.end [8/8] %v320, 128
    %v337 = vpop.trf.xlu0
    %v338 = vpop.trf.xlu0
    %v339 = vpop.trf.xlu0
    %v340 = vpop.trf.xlu0
    %v341 = vpop.trf.xlu0
    %v342 = vpop.trf.xlu0
    %v343 = vpop.trf.xlu0
    %v344 = vpop.trf.xlu0
    %345 = vmatprep.subr.bf16.mxu0 0
    %346 = vmatpush1.bf16.msra.mxu0 %v280
    %347 = vmatprep.subr.bf16.mxu0 0
    %348 = vmatpush1.bf16.msra.mxu0 %v279
    %349 = vmatprep.subr.bf16.mxu0 0
    %350 = vmatpush1.bf16.msra.mxu0 %v278
    %351 = vmatprep.subr.bf16.mxu0 0
    %352 = vmatpush1.bf16.msra.mxu0 %v277
    %353 = vmatprep.subr.bf16.mxu0 0
    %354 = vmatpush1.bf16.msra.mxu0 %v276
    %355 = vmatprep.subr.bf16.mxu0 0
    %356 = vmatpush1.bf16.msra.mxu0 %v275
    %357 = vmatprep.subr.bf16.mxu0 0
    %358 = vmatpush1.bf16.msra.mxu0 %v274
    %359 = vmatprep.subr.bf16.mxu0 0
    %360 = vmatpush1.bf16.msra.mxu0 %v273
    %361 = vmatprep.subr.bf16.mxu0 0
    %362 = vmatpush2.bf16.msra.mxu0 0
    %363 = vmatprep.subr.bf16.mxu0 0
    %364 = vmatpush2.bf16.msra.mxu0 0
    %365 = vmatprep.subr.bf16.mxu0 0
    %366 = vmatpush2.bf16.msra.mxu0 0
    %367 = vmatprep.subr.bf16.mxu0 0
    %368 = vmatpush2.bf16.msra.mxu0 0
    %369 = vmatprep.subr.bf16.mxu0 0
    %370 = vmatpush2.bf16.msra.mxu0 0
    %371 = vmatprep.subr.bf16.mxu0 0
    %372 = vmatpush2.bf16.msra.mxu0 0
    %373 = vmatprep.subr.bf16.mxu0 0
    %374 = vmatpush2.bf16.msra.mxu0 0
    %375 = vmatprep.subr.bf16.mxu0 0
    %376 = vmatpush2.bf16.msra.mxu0 0
    %377 = vmatprep.mubr.bf16.mxu0 0
    %378 = vmatmul.mubr.bf16.gmra.mxu0 %v337
    %v379 = vpop.f32.mrf.mxu0
    %v380 = vadd.f32 0.0, %v379
    %v381 = vpop.f32.mrf.mxu0
    %v382 = vpop.f32.mrf.mxu0
    %v383 = vadd.f32 0.0, %v382
    %v384 = vpop.f32.mrf.mxu0
    %385 = vmatprep.mubr.bf16.mxu0 0
    %386 = vmatmul.mubr.bf16.gmra.mxu0 %v338
    %v387 = vpop.f32.mrf.mxu0
    %v388 = vadd.f32 0.0, %v387
    %v389 = vpop.f32.mrf.mxu0
    %v390 = vpop.f32.mrf.mxu0
    %v391 = vadd.f32 0.0, %v390
    %v392 = vpop.f32.mrf.mxu0
    %393 = vmatprep.mubr.bf16.mxu0 0
    %394 = vmatmul.mubr.bf16.gmra.mxu0 %v339
    %v395 = vpop.f32.mrf.mxu0
    %v396 = vadd.f32 0.0, %v395
    %v397 = vpop.f32.mrf.mxu0
    %v398 = vpop.f32.mrf.mxu0
    %v399 = vadd.f32 0.0, %v398
    %v400 = vpop.f32.mrf.mxu0
    %401 = vmatprep.mubr.bf16.mxu0 0
    %402 = vmatmul.mubr.bf16.gmra.mxu0 %v340
    %v403 = vpop.f32.mrf.mxu0
    %v404 = vadd.f32 0.0, %v403
    %v405 = vpop.f32.mrf.mxu0
    %v406 = vpop.f32.mrf.mxu0
    %v407 = vadd.f32 0.0, %v406
    %v408 = vpop.f32.mrf.mxu0
    %409 = vmatprep.mubr.bf16.mxu0 0
    %410 = vmatmul.mubr.bf16.gmra.mxu0 %v341
    %v411 = vpop.f32.mrf.mxu0
    %v412 = vadd.f32 0.0, %v411
    %v413 = vpop.f32.mrf.mxu0
    %v414 = vpop.f32.mrf.mxu0
    %v415 = vadd.f32 0.0, %v414
    %v416 = vpop.f32.mrf.mxu0
    %417 = vmatprep.mubr.bf16.mxu0 0
    %418 = vmatmul.mubr.bf16.gmra.mxu0 %v342
    %v419 = vpop.f32.mrf.mxu0
    %v420 = vadd.f32 0.0, %v419
    %v421 = vpop.f32.mrf.mxu0
    %v422 = vpop.f32.mrf.mxu0
    %v423 = vadd.f32 0.0, %v422
    %v424 = vpop.f32.mrf.mxu0
    %425 = vmatprep.mubr.bf16.mxu0 0
    %426 = vmatmul.mubr.bf16.gmra.mxu0 %v343
    %v427 = vpop.f32.mrf.mxu0
    %v428 = vadd.f32 0.0, %v427
    %v429 = vpop.f32.mrf.mxu0
    %v430 = vpop.f32.mrf.mxu0
    %v431 = vadd.f32 0.0, %v430
    %v432 = vpop.f32.mrf.mxu0
    %433 = vmatprep.mubr.bf16.mxu0 0
    %434 = vmatmul.mubr.bf16.gmra.mxu0 %v344
    %v435 = vpop.f32.mrf.mxu0
    %v436 = vadd.f32 0.0, %v435
    %v437 = vpop.f32.mrf.mxu0
    %v438 = vpop.f32.mrf.mxu0
    %v439 = vadd.f32 0.0, %v438
    %v440 = vpop.f32.mrf.mxu0
    %441 = vdwg.mxu0
    %443 = vset.pattern.permute.xlu0 0
    %444 = vperm.xlu0 %443, %v257
    %v445 = vpop.permute.xlu0 %444
    %448 = vset.pattern.permute.xlu0 0
    %449 = vperm.xlu0 %448, %v258
    %v450 = vpop.permute.xlu0 %449
    %453 = vset.pattern.permute.xlu0 0
    %454 = vperm.xlu0 %453, %v259
    %v455 = vpop.permute.xlu0 %454
    %458 = vset.pattern.permute.xlu0 0
    %459 = vperm.xlu0 %458, %v260
    %v460 = vpop.permute.xlu0 %459
    %463 = vset.pattern.permute.xlu0 0
    %464 = vperm.xlu0 %463, %v261
    %v465 = vpop.permute.xlu0 %464
    %468 = vset.pattern.permute.xlu0 0
    %469 = vperm.xlu0 %468, %v262
    %v470 = vpop.permute.xlu0 %469
    %473 = vset.pattern.permute.xlu0 0
    %474 = vperm.xlu0 %473, %v263
    %v475 = vpop.permute.xlu0 %474
    %478 = vset.pattern.permute.xlu0 0
    %479 = vperm.xlu0 %478, %v264
    %v480 = vpop.permute.xlu0 %479
    %483 = vset.pattern.permute.xlu0 0
    %484 = vperm.xlu0 %483, %v265
    %v485 = vpop.permute.xlu0 %484
    %488 = vset.pattern.permute.xlu0 0
    %489 = vperm.xlu0 %488, %v266
    %v490 = vpop.permute.xlu0 %489
    %493 = vset.pattern.permute.xlu0 0
    %494 = vperm.xlu0 %493, %v267
    %v495 = vpop.permute.xlu0 %494
    %498 = vset.pattern.permute.xlu0 0
    %499 = vperm.xlu0 %498, %v268
    %v500 = vpop.permute.xlu0 %499
    %503 = vset.pattern.permute.xlu0 0
    %504 = vperm.xlu0 %503, %v269
    %v505 = vpop.permute.xlu0 %504
    %508 = vset.pattern.permute.xlu0 0
    %509 = vperm.xlu0 %508, %v270
    %v510 = vpop.permute.xlu0 %509
    %513 = vset.pattern.permute.xlu0 0
    %514 = vperm.xlu0 %513, %v271
    %v515 = vpop.permute.xlu0 %514
    %518 = vset.pattern.permute.xlu0 0
    %519 = vperm.xlu0 %518, %v272
    %v520 = vpop.permute.xlu0 %519
    %v522 = vmul.f32 %v445, %v380
    %v523 = vmul.f32 %v450, %v383
    %v524 = vmul.f32 %v455, %v388
    %v525 = vmul.f32 %v460, %v391
    %v526 = vmul.f32 %v465, %v396
    %v527 = vmul.f32 %v470, %v399
    %v528 = vmul.f32 %v475, %v404
    %v529 = vmul.f32 %v480, %v407
    %v530 = vmul.f32 %v485, %v412
    %v531 = vmul.f32 %v490, %v415
    %v532 = vmul.f32 %v495, %v420
    %v533 = vmul.f32 %v500, %v423
    %v534 = vmul.f32 %v505, %v428
    %v535 = vmul.f32 %v510, %v431
    %v536 = vmul.f32 %v515, %v436
    %v537 = vmul.f32 %v520, %v439
    %v538 = vld [vmem:[%s6] sm:$0xff]
    %v539 = vld [vmem:[%s6 + $0x8] sm:$0xff]
    %v540 = vld [vmem:[%s6 + $0x10] sm:$0xff]
    %v541 = vld [vmem:[%s6 + $0x18] sm:$0xff]
    %v542 = vld [vmem:[%s6 + $0x20] sm:$0xff]
    %v543 = vld [vmem:[%s6 + $0x28] sm:$0xff]
    %v544 = vld [vmem:[%s6 + $0x30] sm:$0xff]
    %v545 = vld [vmem:[%s6 + $0x38] sm:$0xff]
    %v546 = vld [vmem:[%s6 + $0x40] sm:$0xff]
    %v547 = vld [vmem:[%s6 + $0x48] sm:$0xff]
    %v548 = vld [vmem:[%s6 + $0x50] sm:$0xff]
    %v549 = vld [vmem:[%s6 + $0x58] sm:$0xff]
    %v550 = vld [vmem:[%s6 + $0x60] sm:$0xff]
    %v551 = vld [vmem:[%s6 + $0x68] sm:$0xff]
    %v552 = vld [vmem:[%s6 + $0x70] sm:$0xff]
    %v553 = vld [vmem:[%s6 + $0x78] sm:$0xff]
    %v554 = vpack.c.bf16 %v523, %v522
    %v555 = vpack.c.bf16 %v525, %v524
    %v556 = vpack.c.bf16 %v527, %v526
    %v557 = vpack.c.bf16 %v529, %v528
    %v558 = vpack.c.bf16 %v531, %v530
    %v559 = vpack.c.bf16 %v533, %v532
    %v560 = vpack.c.bf16 %v535, %v534
    %v561 = vpack.c.bf16 %v537, %v536
    %562 = vmatprep.subr.bf16.mxu0 0
    %563 = vmatpush1.bf16.msra.mxu0 %v561
    %564 = vmatprep.subr.bf16.mxu0 0
    %565 = vmatpush1.bf16.msra.mxu0 %v560
    %566 = vmatprep.subr.bf16.mxu0 0
    %567 = vmatpush1.bf16.msra.mxu0 %v559
    %568 = vmatprep.subr.bf16.mxu0 0
    %569 = vmatpush1.bf16.msra.mxu0 %v558
    %570 = vmatprep.subr.bf16.mxu0 0
    %571 = vmatpush1.bf16.msra.mxu0 %v557
    %572 = vmatprep.subr.bf16.mxu0 0
    %573 = vmatpush1.bf16.msra.mxu0 %v556
    %574 = vmatprep.subr.bf16.mxu0 0
    %575 = vmatpush1.bf16.msra.mxu0 %v555
    %576 = vmatprep.subr.bf16.mxu0 0
    %577 = vmatpush1.bf16.msra.mxu0 %v554
    %578 = vmatprep.subr.bf16.mxu0 0
    %579 = vmatpush2.bf16.msra.mxu0 0
    %580 = vmatprep.subr.bf16.mxu0 0
    %581 = vmatpush2.bf16.msra.mxu0 0
    %582 = vmatprep.subr.bf16.mxu0 0
    %583 = vmatpush2.bf16.msra.mxu0 0
    %584 = vmatprep.subr.bf16.mxu0 0
    %585 = vmatpush2.bf16.msra.mxu0 0
    %586 = vmatprep.subr.bf16.mxu0 0
    %587 = vmatpush2.bf16.msra.mxu0 0
    %588 = vmatprep.subr.bf16.mxu0 0
    %589 = vmatpush2.bf16.msra.mxu0 0
    %590 = vmatprep.subr.bf16.mxu0 0
    %591 = vmatpush2.bf16.msra.mxu0 0
    %592 = vmatprep.subr.bf16.mxu0 0
    %593 = vmatpush2.bf16.msra.mxu0 0
    %594 = vmatprep.mubr.bf16.mxu0 0
    %595 = vmatmul.mubr.bf16.gmra.mxu0 %v313
    %v596 = vpop.f32.mrf.mxu0
    %v597 = vadd.f32 0.0, %v596
    %v598 = vpop.f32.mrf.mxu0
    %v599 = vpop.f32.mrf.mxu0
    %v600 = vadd.f32 0.0, %v599
    %v601 = vpop.f32.mrf.mxu0
    %602 = vmatprep.mubr.bf16.mxu0 0
    %603 = vmatmul.mubr.bf16.gmra.mxu0 %v314
    %v604 = vpop.f32.mrf.mxu0
    %v605 = vadd.f32 0.0, %v604
    %v606 = vpop.f32.mrf.mxu0
    %v607 = vpop.f32.mrf.mxu0
    %v608 = vadd.f32 0.0, %v607
    %v609 = vpop.f32.mrf.mxu0
    %610 = vmatprep.mubr.bf16.mxu0 0
    %611 = vmatmul.mubr.bf16.gmra.mxu0 %v315
    %v612 = vpop.f32.mrf.mxu0
    %v613 = vadd.f32 0.0, %v612
    %v614 = vpop.f32.mrf.mxu0
    %v615 = vpop.f32.mrf.mxu0
    %v616 = vadd.f32 0.0, %v615
    %v617 = vpop.f32.mrf.mxu0
    %618 = vmatprep.mubr.bf16.mxu0 0
    %619 = vmatmul.mubr.bf16.gmra.mxu0 %v316
    %v620 = vpop.f32.mrf.mxu0
    %v621 = vadd.f32 0.0, %v620
    %v622 = vpop.f32.mrf.mxu0
    %v623 = vpop.f32.mrf.mxu0
    %v624 = vadd.f32 0.0, %v623
    %v625 = vpop.f32.mrf.mxu0
    %626 = vmatprep.mubr.bf16.mxu0 0
    %627 = vmatmul.mubr.bf16.gmra.mxu0 %v317
    %v628 = vpop.f32.mrf.mxu0
    %v629 = vadd.f32 0.0, %v628
    %v630 = vpop.f32.mrf.mxu0
    %v631 = vpop.f32.mrf.mxu0
    %v632 = vadd.f32 0.0, %v631
    %v633 = vpop.f32.mrf.mxu0
    %634 = vmatprep.mubr.bf16.mxu0 0
    %635 = vmatmul.mubr.bf16.gmra.mxu0 %v318
    %v636 = vpop.f32.mrf.mxu0
    %v637 = vadd.f32 0.0, %v636
    %v638 = vpop.f32.mrf.mxu0
    %v639 = vpop.f32.mrf.mxu0
    %v640 = vadd.f32 0.0, %v639
    %v641 = vpop.f32.mrf.mxu0
    %642 = vmatprep.mubr.bf16.mxu0 0
    %643 = vmatmul.mubr.bf16.gmra.mxu0 %v319
    %v644 = vpop.f32.mrf.mxu0
    %v645 = vadd.f32 0.0, %v644
    %v646 = vpop.f32.mrf.mxu0
    %v647 = vpop.f32.mrf.mxu0
    %v648 = vadd.f32 0.0, %v647
    %v649 = vpop.f32.mrf.mxu0
    %650 = vmatprep.mubr.bf16.mxu0 0
    %651 = vmatmul.mubr.bf16.gmra.mxu0 %v320
    %v652 = vpop.f32.mrf.mxu0
    %v653 = vadd.f32 0.0, %v652
    %v654 = vpop.f32.mrf.mxu0
    %v655 = vpop.f32.mrf.mxu0
    %v656 = vadd.f32 0.0, %v655
    %v657 = vpop.f32.mrf.mxu0
    %658 = vdwg.mxu0
    %660 = vset.pattern.permute.xlu0 0
    %661 = vperm.xlu0 %660, %v538
    %v662 = vpop.permute.xlu0 %661
    %665 = vset.pattern.permute.xlu0 0
    %666 = vperm.xlu0 %665, %v539
    %v667 = vpop.permute.xlu0 %666
    %670 = vset.pattern.permute.xlu0 0
    %671 = vperm.xlu0 %670, %v540
    %v672 = vpop.permute.xlu0 %671
    %675 = vset.pattern.permute.xlu0 0
    %676 = vperm.xlu0 %675, %v541
    %v677 = vpop.permute.xlu0 %676
    %680 = vset.pattern.permute.xlu0 0
    %681 = vperm.xlu0 %680, %v542
    %v682 = vpop.permute.xlu0 %681
    %685 = vset.pattern.permute.xlu0 0
    %686 = vperm.xlu0 %685, %v543
    %v687 = vpop.permute.xlu0 %686
    %690 = vset.pattern.permute.xlu0 0
    %691 = vperm.xlu0 %690, %v544
    %v692 = vpop.permute.xlu0 %691
    %695 = vset.pattern.permute.xlu0 0
    %696 = vperm.xlu0 %695, %v545
    %v697 = vpop.permute.xlu0 %696
    %700 = vset.pattern.permute.xlu0 0
    %701 = vperm.xlu0 %700, %v546
    %v702 = vpop.permute.xlu0 %701
    %705 = vset.pattern.permute.xlu0 0
    %706 = vperm.xlu0 %705, %v547
    %v707 = vpop.permute.xlu0 %706
    %710 = vset.pattern.permute.xlu0 0
    %711 = vperm.xlu0 %710, %v548
    %v712 = vpop.permute.xlu0 %711
    %715 = vset.pattern.permute.xlu0 0
    %716 = vperm.xlu0 %715, %v549
    %v717 = vpop.permute.xlu0 %716
    %720 = vset.pattern.permute.xlu0 0
    %721 = vperm.xlu0 %720, %v550
    %v722 = vpop.permute.xlu0 %721
    %725 = vset.pattern.permute.xlu0 0
    %726 = vperm.xlu0 %725, %v551
    %v727 = vpop.permute.xlu0 %726
    %730 = vset.pattern.permute.xlu0 0
    %731 = vperm.xlu0 %730, %v552
    %v732 = vpop.permute.xlu0 %731
    %735 = vset.pattern.permute.xlu0 0
    %736 = vperm.xlu0 %735, %v553
    %v737 = vpop.permute.xlu0 %736
    %v739 = vmul.f32 %v662, %v597
    %v740 = vmul.f32 %v667, %v600
    %v741 = vmul.f32 %v672, %v605
    %v742 = vmul.f32 %v677, %v608
    %v743 = vmul.f32 %v682, %v613
    %v744 = vmul.f32 %v687, %v616
    %v745 = vmul.f32 %v692, %v621
    %v746 = vmul.f32 %v697, %v624
    %v747 = vmul.f32 %v702, %v629
    %v748 = vmul.f32 %v707, %v632
    %v749 = vmul.f32 %v712, %v637
    %v750 = vmul.f32 %v717, %v640
    %v751 = vmul.f32 %v722, %v645
    %v752 = vmul.f32 %v727, %v648
    %v753 = vmul.f32 %v732, %v653
    %v754 = vmul.f32 %v737, %v656
    %v755 = vld [vmem:[%s3] sm:$0x1]
    %v757 = vlaneseq
    %v758 = vshrl.u32 %v757, 7
    %v759 = vsub.s32 0, %v758
    %v760 = vrot.slane %v755, %v759
    %v762 = vadd.f32 %v739, %v760
    %v763 = vadd.f32 %v740, %v760
    %v764 = vadd.f32 %v741, %v760
    %v765 = vadd.f32 %v742, %v760
    %v766 = vadd.f32 %v743, %v760
    %v767 = vadd.f32 %v744, %v760
    %v768 = vadd.f32 %v745, %v760
    %v769 = vadd.f32 %v746, %v760
    %v770 = vadd.f32 %v747, %v760
    %v771 = vadd.f32 %v748, %v760
    %v772 = vadd.f32 %v749, %v760
    %v773 = vadd.f32 %v750, %v760
    %v774 = vadd.f32 %v751, %v760
    %v775 = vadd.f32 %v752, %v760
    %v776 = vadd.f32 %v753, %v760
    %v777 = vadd.f32 %v754, %v760
    %v778 = vmax.f32 %v762, 0.0
    %v779 = vmax.f32 %v763, 0.0
    %v780 = vmax.f32 %v764, 0.0
    %v781 = vmax.f32 %v765, 0.0
    %v782 = vmax.f32 %v766, 0.0
    %v783 = vmax.f32 %v767, 0.0
    %v784 = vmax.f32 %v768, 0.0
    %v785 = vmax.f32 %v769, 0.0
    %v786 = vmax.f32 %v770, 0.0
    %v787 = vmax.f32 %v771, 0.0
    %v788 = vmax.f32 %v772, 0.0
    %v789 = vmax.f32 %v773, 0.0
    %v790 = vmax.f32 %v774, 0.0
    %v791 = vmax.f32 %v775, 0.0
    %v792 = vmax.f32 %v776, 0.0
    %v793 = vmax.f32 %v777, 0.0
    %v794 = vmin.f32 %v762, 0.0
    %v795 = vmin.f32 %v763, 0.0
    %v796 = vmin.f32 %v764, 0.0
    %v797 = vmin.f32 %v765, 0.0
    %v798 = vmin.f32 %v766, 0.0
    %v799 = vmin.f32 %v767, 0.0
    %v800 = vmin.f32 %v768, 0.0
    %v801 = vmin.f32 %v769, 0.0
    %v802 = vmin.f32 %v770, 0.0
    %v803 = vmin.f32 %v771, 0.0
    %v804 = vmin.f32 %v772, 0.0
    %v805 = vmin.f32 %v773, 0.0
    %v806 = vmin.f32 %v774, 0.0
    %v807 = vmin.f32 %v775, 0.0
    %v808 = vmin.f32 %v776, 0.0
    %v809 = vmin.f32 %v777, 0.0
    %v810 = vstv %s63
    %v811 = vmul.f32 %v810, %v794
    %v812 = vmul.f32 %v810, %v795
    %v813 = vmul.f32 %v810, %v796
    %v814 = vmul.f32 %v810, %v797
    %v815 = vmul.f32 %v810, %v798
    %v816 = vmul.f32 %v810, %v799
    %v817 = vmul.f32 %v810, %v800
    %v818 = vmul.f32 %v810, %v801
    %v819 = vmul.f32 %v810, %v802
    %v820 = vmul.f32 %v810, %v803
    %v821 = vmul.f32 %v810, %v804
    %v822 = vmul.f32 %v810, %v805
    %v823 = vmul.f32 %v810, %v806
    %v824 = vmul.f32 %v810, %v807
    %v825 = vmul.f32 %v810, %v808
    %v826 = vmul.f32 %v810, %v809
    %v827 = vadd.f32 %v778, %v811
    %v828 = vadd.f32 %v779, %v812
    %v829 = vadd.f32 %v780, %v813
    %v830 = vadd.f32 %v781, %v814
    %v831 = vadd.f32 %v782, %v815
    %v832 = vadd.f32 %v783, %v816
    %v833 = vadd.f32 %v784, %v817
    %v834 = vadd.f32 %v785, %v818
    %v835 = vadd.f32 %v786, %v819
    %v836 = vadd.f32 %v787, %v820
    %v837 = vadd.f32 %v788, %v821
    %v838 = vadd.f32 %v789, %v822
    %v839 = vadd.f32 %v790, %v823
    %v840 = vadd.f32 %v791, %v824
    %v841 = vadd.f32 %v792, %v825
    %v842 = vadd.f32 %v793, %v826
    %v843 = vld [vmem:[#allocation6] sm:$0xff]
    %v844 = vld [vmem:[#allocation6 + $0x8] sm:$0xff]
    %v845 = vld [vmem:[#allocation6 + $0x10] sm:$0xff]
    %v846 = vld [vmem:[#allocation6 + $0x18] sm:$0xff]
    %v847 = vld [vmem:[#allocation6 + $0x20] sm:$0xff]
    %v848 = vld [vmem:[#allocation6 + $0x28] sm:$0xff]
    %v849 = vld [vmem:[#allocation6 + $0x30] sm:$0xff]
    %v850 = vld [vmem:[#allocation6 + $0x38] sm:$0xff]
    %v851 = vld [vmem:[#allocation6 + $0x40] sm:$0xff]
    %v852 = vld [vmem:[#allocation6 + $0x48] sm:$0xff]
    %v853 = vld [vmem:[#allocation6 + $0x50] sm:$0xff]
    %v854 = vld [vmem:[#allocation6 + $0x58] sm:$0xff]
    %v855 = vld [vmem:[#allocation6 + $0x60] sm:$0xff]
    %v856 = vld [vmem:[#allocation6 + $0x68] sm:$0xff]
    %v857 = vld [vmem:[#allocation6 + $0x70] sm:$0xff]
    %v858 = vld [vmem:[#allocation6 + $0x78] sm:$0xff]
    %859 = vmatprep.subr.mxu0 0.0
    %860 = vmatpush1.msra.mxu0 %v858
    %861 = vmatprep.subr.mxu0 0.0
    %862 = vmatpush1.msra.mxu0 %v857
    %863 = vmatprep.subr.mxu0 0.0
    %864 = vmatpush1.msra.mxu0 %v856
    %865 = vmatprep.subr.mxu0 0.0
    %866 = vmatpush1.msra.mxu0 %v855
    %867 = vmatprep.subr.mxu0 0.0
    %868 = vmatpush1.msra.mxu0 %v854
    %869 = vmatprep.subr.mxu0 0.0
    %870 = vmatpush1.msra.mxu0 %v853
    %871 = vmatprep.subr.mxu0 0.0
    %872 = vmatpush1.msra.mxu0 %v852
    %873 = vmatprep.subr.mxu0 0.0
    %874 = vmatpush1.msra.mxu0 %v851
    %875 = vmatprep.subr.mxu0 0.0
    %876 = vmatpush1.msra.mxu0 %v850
    %877 = vmatprep.subr.mxu0 0.0
    %878 = vmatpush1.msra.mxu0 %v849
    %879 = vmatprep.subr.mxu0 0.0
    %880 = vmatpush1.msra.mxu0 %v848
    %881 = vmatprep.subr.mxu0 0.0
    %882 = vmatpush1.msra.mxu0 %v847
    %883 = vmatprep.subr.mxu0 0.0
    %884 = vmatpush1.msra.mxu0 %v846
    %885 = vmatprep.subr.mxu0 0.0
    %886 = vmatpush1.msra.mxu0 %v845
    %887 = vmatprep.subr.mxu0 0.0
    %888 = vmatpush1.msra.mxu0 %v844
    %889 = vmatprep.subr.mxu0 0.0
    %890 = vmatpush1.msra.mxu0 %v843
    %891 = vmatprep.subr.mxu0 0.0
    %892 = vmatpush2.msra.mxu0 0.0
    %893 = vmatprep.subr.mxu0 0.0
    %894 = vmatpush2.msra.mxu0 0.0
    %895 = vmatprep.subr.mxu0 0.0
    %896 = vmatpush2.msra.mxu0 0.0
    %897 = vmatprep.subr.mxu0 0.0
    %898 = vmatpush2.msra.mxu0 0.0
    %899 = vmatprep.subr.mxu0 0.0
    %900 = vmatpush2.msra.mxu0 0.0
    %901 = vmatprep.subr.mxu0 0.0
    %902 = vmatpush2.msra.mxu0 0.0
    %903 = vmatprep.subr.mxu0 0.0
    %904 = vmatpush2.msra.mxu0 0.0
    %905 = vmatprep.subr.mxu0 0.0
    %906 = vmatpush2.msra.mxu0 0.0
    %907 = vmatprep.subr.mxu0 0.0
    %908 = vmatpush2.msra.mxu0 0.0
    %909 = vmatprep.subr.mxu0 0.0
    %910 = vmatpush2.msra.mxu0 0.0
    %911 = vmatprep.subr.mxu0 0.0
    %912 = vmatpush2.msra.mxu0 0.0
    %913 = vmatprep.subr.mxu0 0.0
    %914 = vmatpush2.msra.mxu0 0.0
    %915 = vmatprep.subr.mxu0 0.0
    %916 = vmatpush2.msra.mxu0 0.0
    %917 = vmatprep.subr.mxu0 0.0
    %918 = vmatpush2.msra.mxu0 0.0
    %919 = vmatprep.subr.mxu0 0.0
    %920 = vmatpush2.msra.mxu0 0.0
    %921 = vmatprep.subr.mxu0 0.0
    %922 = vmatpush2.msra.mxu0 0.0
    %923 = vmatprep.mubr.f32.mxu0 0.0
    %924 = vmatmul.mubr.f32.gmra.mxu0 %v827
    %v925 = vpop.f32.mrf.mxu0
    %v926 = vadd.f32 0.0, %v925
    %v927 = vpop.f32.mrf.mxu0
    %928 = vmatprep.mubr.f32.mxu0 0.0
    %929 = vmatmul.mubr.f32.gmra.mxu0 %v828
    %v930 = vpop.f32.mrf.mxu0
    %v931 = vadd.f32 0.0, %v930
    %v932 = vpop.f32.mrf.mxu0
    %933 = vmatprep.mubr.f32.mxu0 0.0
    %934 = vmatmul.mubr.f32.gmra.mxu0 %v829
    %v935 = vpop.f32.mrf.mxu0
    %v936 = vadd.f32 0.0, %v935
    %v937 = vpop.f32.mrf.mxu0
    %938 = vmatprep.mubr.f32.mxu0 0.0
    %939 = vmatmul.mubr.f32.gmra.mxu0 %v830
    %v940 = vpop.f32.mrf.mxu0
    %v941 = vadd.f32 0.0, %v940
    %v942 = vpop.f32.mrf.mxu0
    %943 = vmatprep.mubr.f32.mxu0 0.0
    %944 = vmatmul.mubr.f32.gmra.mxu0 %v831
    %v945 = vpop.f32.mrf.mxu0
    %v946 = vadd.f32 0.0, %v945
    %v947 = vpop.f32.mrf.mxu0
    %948 = vmatprep.mubr.f32.mxu0 0.0
    %949 = vmatmul.mubr.f32.gmra.mxu0 %v832
    %v950 = vpop.f32.mrf.mxu0
    %v951 = vadd.f32 0.0, %v950
    %v952 = vpop.f32.mrf.mxu0
    %953 = vmatprep.mubr.f32.mxu0 0.0
    %954 = vmatmul.mubr.f32.gmra.mxu0 %v833
    %v955 = vpop.f32.mrf.mxu0
    %v956 = vadd.f32 0.0, %v955
    %v957 = vpop.f32.mrf.mxu0
    %958 = vmatprep.mubr.f32.mxu0 0.0
    %959 = vmatmul.mubr.f32.gmra.mxu0 %v834
    %v960 = vpop.f32.mrf.mxu0
    %v961 = vadd.f32 0.0, %v960
    %v962 = vpop.f32.mrf.mxu0
    %963 = vmatprep.mubr.f32.mxu0 0.0
    %964 = vmatmul.mubr.f32.gmra.mxu0 %v835
    %v965 = vpop.f32.mrf.mxu0
    %v966 = vadd.f32 0.0, %v965
    %v967 = vpop.f32.mrf.mxu0
    %968 = vmatprep.mubr.f32.mxu0 0.0
    %969 = vmatmul.mubr.f32.gmra.mxu0 %v836
    %v970 = vpop.f32.mrf.mxu0
    %v971 = vadd.f32 0.0, %v970
    %v972 = vpop.f32.mrf.mxu0
    %973 = vmatprep.mubr.f32.mxu0 0.0
    %974 = vmatmul.mubr.f32.gmra.mxu0 %v837
    %v975 = vpop.f32.mrf.mxu0
    %v976 = vadd.f32 0.0, %v975
    %v977 = vpop.f32.mrf.mxu0
    %978 = vmatprep.mubr.f32.mxu0 0.0
    %979 = vmatmul.mubr.f32.gmra.mxu0 %v838
    %v980 = vpop.f32.mrf.mxu0
    %v981 = vadd.f32 0.0, %v980
    %v982 = vpop.f32.mrf.mxu0
    %983 = vmatprep.mubr.f32.mxu0 0.0
    %984 = vmatmul.mubr.f32.gmra.mxu0 %v839
    %v985 = vpop.f32.mrf.mxu0
    %v986 = vadd.f32 0.0, %v985
    %v987 = vpop.f32.mrf.mxu0
    %988 = vmatprep.mubr.f32.mxu0 0.0
    %989 = vmatmul.mubr.f32.gmra.mxu0 %v840
    %v990 = vpop.f32.mrf.mxu0
    %v991 = vadd.f32 0.0, %v990
    %v992 = vpop.f32.mrf.mxu0
    %993 = vmatprep.mubr.f32.mxu0 0.0
    %994 = vmatmul.mubr.f32.gmra.mxu0 %v841
    %v995 = vpop.f32.mrf.mxu0
    %v996 = vadd.f32 0.0, %v995
    %v997 = vpop.f32.mrf.mxu0
    %998 = vmatprep.mubr.f32.mxu0 0.0
    %999 = vmatmul.mubr.f32.gmra.mxu0 %v842
    %v1000 = vpop.f32.mrf.mxu0
    %v1001 = vadd.f32 0.0, %v1000
    %v1002 = vpop.f32.mrf.mxu0
    %1003 = vdwg.mxu0
    %v1004 = vpack.c.bf16 %v931, %v926
    %v1005 = vpack.c.bf16 %v941, %v936
    %v1006 = vpack.c.bf16 %v951, %v946
    %v1007 = vpack.c.bf16 %v961, %v956
    %v1008 = vpack.c.bf16 %v971, %v966
    %v1009 = vpack.c.bf16 %v981, %v976
    %v1010 = vpack.c.bf16 %v991, %v986
    %v1011 = vpack.c.bf16 %v1001, %v996
    %1012 = vmatprep.subr.bf16.mxu0 0
    %1013 = vmatpush1.bf16.msra.mxu0 %v1011
    %1014 = vmatprep.subr.bf16.mxu0 0
    %1015 = vmatpush1.bf16.msra.mxu0 %v1010
    %1016 = vmatprep.subr.bf16.mxu0 0
    %1017 = vmatpush1.bf16.msra.mxu0 %v1009
    %1018 = vmatprep.subr.bf16.mxu0 0
    %1019 = vmatpush1.bf16.msra.mxu0 %v1008
    %1020 = vmatprep.subr.bf16.mxu0 0
    %1021 = vmatpush1.bf16.msra.mxu0 %v1007
    %1022 = vmatprep.subr.bf16.mxu0 0
    %1023 = vmatpush1.bf16.msra.mxu0 %v1006
    %1024 = vmatprep.subr.bf16.mxu0 0
    %1025 = vmatpush1.bf16.msra.mxu0 %v1005
    %1026 = vmatprep.subr.bf16.mxu0 0
    %1027 = vmatpush1.bf16.msra.mxu0 %v1004
    %1028 = vmatprep.subr.bf16.mxu0 0
    %1029 = vmatpush2.bf16.msra.mxu0 0
    %1030 = vmatprep.subr.bf16.mxu0 0
    %1031 = vmatpush2.bf16.msra.mxu0 0
    %1032 = vmatprep.subr.bf16.mxu0 0
    %1033 = vmatpush2.bf16.msra.mxu0 0
    %1034 = vmatprep.subr.bf16.mxu0 0
    %1035 = vmatpush2.bf16.msra.mxu0 0
    %1036 = vmatprep.subr.bf16.mxu0 0
    %1037 = vmatpush2.bf16.msra.mxu0 0
    %1038 = vmatprep.subr.bf16.mxu0 0
    %1039 = vmatpush2.bf16.msra.mxu0 0
    %1040 = vmatprep.subr.bf16.mxu0 0
    %1041 = vmatpush2.bf16.msra.mxu0 0
    %1042 = vmatprep.subr.bf16.mxu0 0
    %1043 = vmatpush2.bf16.msra.mxu0 0
    %1044 = vmatprep.mubr.bf16.mxu0 0
    %1045 = vmatmul.mubr.bf16.gmra.mxu0 %v337
    %v1046 = vpop.f32.mrf.mxu0
    %v1047 = vadd.f32 0.0, %v1046
    %v1048 = vpop.f32.mrf.mxu0
    %v1049 = vpop.f32.mrf.mxu0
    %v1050 = vadd.f32 0.0, %v1049
    %v1051 = vpop.f32.mrf.mxu0
    %1052 = vmatprep.mubr.bf16.mxu0 0
    %1053 = vmatmul.mubr.bf16.gmra.mxu0 %v338
    %v1054 = vpop.f32.mrf.mxu0
    %v1055 = vadd.f32 0.0, %v1054
    %v1056 = vpop.f32.mrf.mxu0
    %v1057 = vpop.f32.mrf.mxu0
    %v1058 = vadd.f32 0.0, %v1057
    %v1059 = vpop.f32.mrf.mxu0
    %1060 = vmatprep.mubr.bf16.mxu0 0
    %1061 = vmatmul.mubr.bf16.gmra.mxu0 %v339
    %v1062 = vpop.f32.mrf.mxu0
    %v1063 = vadd.f32 0.0, %v1062
    %v1064 = vpop.f32.mrf.mxu0
    %v1065 = vpop.f32.mrf.mxu0
    %v1066 = vadd.f32 0.0, %v1065
    %v1067 = vpop.f32.mrf.mxu0
    %1068 = vmatprep.mubr.bf16.mxu0 0
    %1069 = vmatmul.mubr.bf16.gmra.mxu0 %v340
    %v1070 = vpop.f32.mrf.mxu0
    %v1071 = vadd.f32 0.0, %v1070
    %v1072 = vpop.f32.mrf.mxu0
    %v1073 = vpop.f32.mrf.mxu0
    %v1074 = vadd.f32 0.0, %v1073
    %v1075 = vpop.f32.mrf.mxu0
    %1076 = vmatprep.mubr.bf16.mxu0 0
    %1077 = vmatmul.mubr.bf16.gmra.mxu0 %v341
    %v1078 = vpop.f32.mrf.mxu0
    %v1079 = vadd.f32 0.0, %v1078
    %v1080 = vpop.f32.mrf.mxu0
    %v1081 = vpop.f32.mrf.mxu0
    %v1082 = vadd.f32 0.0, %v1081
    %v1083 = vpop.f32.mrf.mxu0
    %1084 = vmatprep.mubr.bf16.mxu0 0
    %1085 = vmatmul.mubr.bf16.gmra.mxu0 %v342
    %v1086 = vpop.f32.mrf.mxu0
    %v1087 = vadd.f32 0.0, %v1086
    %v1088 = vpop.f32.mrf.mxu0
    %v1089 = vpop.f32.mrf.mxu0
    %v1090 = vadd.f32 0.0, %v1089
    %v1091 = vpop.f32.mrf.mxu0
    %1092 = vmatprep.mubr.bf16.mxu0 0
    %1093 = vmatmul.mubr.bf16.gmra.mxu0 %v343
    %v1094 = vpop.f32.mrf.mxu0
    %v1095 = vadd.f32 0.0, %v1094
    %v1096 = vpop.f32.mrf.mxu0
    %v1097 = vpop.f32.mrf.mxu0
    %v1098 = vadd.f32 0.0, %v1097
    %v1099 = vpop.f32.mrf.mxu0
    %1100 = vmatprep.mubr.bf16.mxu0 0
    %1101 = vmatmul.mubr.bf16.gmra.mxu0 %v344
    %v1102 = vpop.f32.mrf.mxu0
    %v1103 = vadd.f32 0.0, %v1102
    %v1104 = vpop.f32.mrf.mxu0
    %v1105 = vpop.f32.mrf.mxu0
    %v1106 = vadd.f32 0.0, %v1105
    %v1107 = vpop.f32.mrf.mxu0
    %1108 = vdwg.mxu0
    %v1109 = vmul.f32 %v445, %v1047
    %v1110 = vmul.f32 %v450, %v1050
    %v1111 = vmul.f32 %v455, %v1055
    %v1112 = vmul.f32 %v460, %v1058
    %v1113 = vmul.f32 %v465, %v1063
    %v1114 = vmul.f32 %v470, %v1066
    %v1115 = vmul.f32 %v475, %v1071
    %v1116 = vmul.f32 %v480, %v1074
    %v1117 = vmul.f32 %v485, %v1079
    %v1118 = vmul.f32 %v490, %v1082
    %v1119 = vmul.f32 %v495, %v1087
    %v1120 = vmul.f32 %v500, %v1090
    %v1121 = vmul.f32 %v505, %v1095
    %v1122 = vmul.f32 %v510, %v1098
    %v1123 = vmul.f32 %v515, %v1103
    %v1124 = vmul.f32 %v520, %v1106
    %v1125 = vpack.c.bf16 %v1110, %v1109
    %v1126 = vpack.c.bf16 %v1112, %v1111
    %v1127 = vpack.c.bf16 %v1114, %v1113
    %v1128 = vpack.c.bf16 %v1116, %v1115
    %v1129 = vpack.c.bf16 %v1118, %v1117
    %v1130 = vpack.c.bf16 %v1120, %v1119
    %v1131 = vpack.c.bf16 %v1122, %v1121
    %v1132 = vpack.c.bf16 %v1124, %v1123
    %1133 = vmatprep.subr.bf16.mxu0 0
    %1134 = vmatpush1.bf16.msra.mxu0 %v1132
    %1135 = vmatprep.subr.bf16.mxu0 0
    %1136 = vmatpush1.bf16.msra.mxu0 %v1131
    %1137 = vmatprep.subr.bf16.mxu0 0
    %1138 = vmatpush1.bf16.msra.mxu0 %v1130
    %1139 = vmatprep.subr.bf16.mxu0 0
    %1140 = vmatpush1.bf16.msra.mxu0 %v1129
    %1141 = vmatprep.subr.bf16.mxu0 0
    %1142 = vmatpush1.bf16.msra.mxu0 %v1128
    %1143 = vmatprep.subr.bf16.mxu0 0
    %1144 = vmatpush1.bf16.msra.mxu0 %v1127
    %1145 = vmatprep.subr.bf16.mxu0 0
    %1146 = vmatpush1.bf16.msra.mxu0 %v1126
    %1147 = vmatprep.subr.bf16.mxu0 0
    %1148 = vmatpush1.bf16.msra.mxu0 %v1125
    %1149 = vmatprep.subr.bf16.mxu0 0
    %1150 = vmatpush2.bf16.msra.mxu0 0
    %1151 = vmatprep.subr.bf16.mxu0 0
    %1152 = vmatpush2.bf16.msra.mxu0 0
    %1153 = vmatprep.subr.bf16.mxu0 0
    %1154 = vmatpush2.bf16.msra.mxu0 0
    %1155 = vmatprep.subr.bf16.mxu0 0
    %1156 = vmatpush2.bf16.msra.mxu0 0
    %1157 = vmatprep.subr.bf16.mxu0 0
    %1158 = vmatpush2.bf16.msra.mxu0 0
    %1159 = vmatprep.subr.bf16.mxu0 0
    %1160 = vmatpush2.bf16.msra.mxu0 0
    %1161 = vmatprep.subr.bf16.mxu0 0
    %1162 = vmatpush2.bf16.msra.mxu0 0
    %1163 = vmatprep.subr.bf16.mxu0 0
    %1164 = vmatpush2.bf16.msra.mxu0 0
    %1165 = vmatprep.mubr.bf16.mxu0 0
    %1166 = vmatmul.mubr.bf16.gmra.mxu0 %v313
    %v1167 = vpop.f32.mrf.mxu0
    %v1168 = vadd.f32 0.0, %v1167
    %v1169 = vpop.f32.mrf.mxu0
    %v1170 = vpop.f32.mrf.mxu0
    %v1171 = vadd.f32 0.0, %v1170
    %v1172 = vpop.f32.mrf.mxu0
    %1173 = vmatprep.mubr.bf16.mxu0 0
    %1174 = vmatmul.mubr.bf16.gmra.mxu0 %v314
    %v1175 = vpop.f32.mrf.mxu0
    %v1176 = vadd.f32 0.0, %v1175
    %v1177 = vpop.f32.mrf.mxu0
    %v1178 = vpop.f32.mrf.mxu0
    %v1179 = vadd.f32 0.0, %v1178
    %v1180 = vpop.f32.mrf.mxu0
    %1181 = vmatprep.mubr.bf16.mxu0 0
    %1182 = vmatmul.mubr.bf16.gmra.mxu0 %v315
    %v1183 = vpop.f32.mrf.mxu0
    %v1184 = vadd.f32 0.0, %v1183
    %v1185 = vpop.f32.mrf.mxu0
    %v1186 = vpop.f32.mrf.mxu0
    %v1187 = vadd.f32 0.0, %v1186
    %v1188 = vpop.f32.mrf.mxu0
    %1189 = vmatprep.mubr.bf16.mxu0 0
    %1190 = vmatmul.mubr.bf16.gmra.mxu0 %v316
    %v1191 = vpop.f32.mrf.mxu0
    %v1192 = vadd.f32 0.0, %v1191
    %v1193 = vpop.f32.mrf.mxu0
    %v1194 = vpop.f32.mrf.mxu0
    %v1195 = vadd.f32 0.0, %v1194
    %v1196 = vpop.f32.mrf.mxu0
    %1197 = vmatprep.mubr.bf16.mxu0 0
    %1198 = vmatmul.mubr.bf16.gmra.mxu0 %v317
    %v1199 = vpop.f32.mrf.mxu0
    %v1200 = vadd.f32 0.0, %v1199
    %v1201 = vpop.f32.mrf.mxu0
    %v1202 = vpop.f32.mrf.mxu0
    %v1203 = vadd.f32 0.0, %v1202
    %v1204 = vpop.f32.mrf.mxu0
    %1205 = vmatprep.mubr.bf16.mxu0 0
    %1206 = vmatmul.mubr.bf16.gmra.mxu0 %v318
    %v1207 = vpop.f32.mrf.mxu0
    %v1208 = vadd.f32 0.0, %v1207
    %v1209 = vpop.f32.mrf.mxu0
    %v1210 = vpop.f32.mrf.mxu0
    %v1211 = vadd.f32 0.0, %v1210
    %v1212 = vpop.f32.mrf.mxu0
    %1213 = vmatprep.mubr.bf16.mxu0 0
    %1214 = vmatmul.mubr.bf16.gmra.mxu0 %v319
    %v1215 = vpop.f32.mrf.mxu0
    %v1216 = vadd.f32 0.0, %v1215
    %v1217 = vpop.f32.mrf.mxu0
    %v1218 = vpop.f32.mrf.mxu0
    %v1219 = vadd.f32 0.0, %v1218
    %v1220 = vpop.f32.mrf.mxu0
    %1221 = vmatprep.mubr.bf16.mxu0 0
    %1222 = vmatmul.mubr.bf16.gmra.mxu0 %v320
    %v1223 = vpop.f32.mrf.mxu0
    %v1224 = vadd.f32 0.0, %v1223
    %v1225 = vpop.f32.mrf.mxu0
    %v1226 = vpop.f32.mrf.mxu0
    %v1227 = vadd.f32 0.0, %v1226
    %v1228 = vpop.f32.mrf.mxu0
    %1229 = vdwg.mxu0
    %v1230 = vmul.f32 %v662, %v1168
    %v1231 = vmul.f32 %v667, %v1171
    %v1232 = vmul.f32 %v672, %v1176
    %v1233 = vmul.f32 %v677, %v1179
    %v1234 = vmul.f32 %v682, %v1184
    %v1235 = vmul.f32 %v687, %v1187
    %v1236 = vmul.f32 %v692, %v1192
    %v1237 = vmul.f32 %v697, %v1195
    %v1238 = vmul.f32 %v702, %v1200
    %v1239 = vmul.f32 %v707, %v1203
    %v1240 = vmul.f32 %v712, %v1208
    %v1241 = vmul.f32 %v717, %v1211
    %v1242 = vmul.f32 %v722, %v1216
    %v1243 = vmul.f32 %v727, %v1219
    %v1244 = vmul.f32 %v732, %v1224
    %v1245 = vmul.f32 %v737, %v1227
    %v1246 = vld [vmem:[%s5] sm:$0x1]
    %v1248 = vlaneseq
    %v1249 = vshrl.u32 %v1248, 7
    %v1250 = vsub.s32 0, %v1249
    %v1251 = vrot.slane %v1246, %v1250
    %v1253 = vadd.f32 %v1230, %v1251
    %v1254 = vadd.f32 %v1231, %v1251
    %v1255 = vadd.f32 %v1232, %v1251
    %v1256 = vadd.f32 %v1233, %v1251
    %v1257 = vadd.f32 %v1234, %v1251
    %v1258 = vadd.f32 %v1235, %v1251
    %v1259 = vadd.f32 %v1236, %v1251
    %v1260 = vadd.f32 %v1237, %v1251
    %v1261 = vadd.f32 %v1238, %v1251
    %v1262 = vadd.f32 %v1239, %v1251
    %v1263 = vadd.f32 %v1240, %v1251
    %v1264 = vadd.f32 %v1241, %v1251
    %v1265 = vadd.f32 %v1242, %v1251
    %v1266 = vadd.f32 %v1243, %v1251
    %v1267 = vadd.f32 %v1244, %v1251
    %v1268 = vadd.f32 %v1245, %v1251
    %v1269 = vadd.f32 %v1253, %v80
    %v1270 = vadd.f32 %v1254, %v81
    %v1271 = vadd.f32 %v1255, %v82
    %v1272 = vadd.f32 %v1256, %v83
    %v1273 = vadd.f32 %v1257, %v84
    %v1274 = vadd.f32 %v1258, %v85
    %v1275 = vadd.f32 %v1259, %v86
    %v1276 = vadd.f32 %v1260, %v87
    %v1277 = vadd.f32 %v1261, %v88
    %v1278 = vadd.f32 %v1262, %v89
    %v1279 = vadd.f32 %v1263, %v90
    %v1280 = vadd.f32 %v1264, %v91
    %v1281 = vadd.f32 %v1265, %v92
    %v1282 = vadd.f32 %v1266, %v93
    %v1283 = vadd.f32 %v1267, %v94
    %v1284 = vadd.f32 %v1268, %v95
    %v1285 = vmax.f32 %v1269, 0.0
    %v1286 = vmax.f32 %v1270, 0.0
    %v1287 = vmax.f32 %v1271, 0.0
    %v1288 = vmax.f32 %v1272, 0.0
    %v1289 = vmax.f32 %v1273, 0.0
    %v1290 = vmax.f32 %v1274, 0.0
    %v1291 = vmax.f32 %v1275, 0.0
    %v1292 = vmax.f32 %v1276, 0.0
    %v1293 = vmax.f32 %v1277, 0.0
    %v1294 = vmax.f32 %v1278, 0.0
    %v1295 = vmax.f32 %v1279, 0.0
    %v1296 = vmax.f32 %v1280, 0.0
    %v1297 = vmax.f32 %v1281, 0.0
    %v1298 = vmax.f32 %v1282, 0.0
    %v1299 = vmax.f32 %v1283, 0.0
    %v1300 = vmax.f32 %v1284, 0.0
    %v1301 = vmin.f32 %v1269, 0.0
    %v1302 = vmin.f32 %v1270, 0.0
    %v1303 = vmin.f32 %v1271, 0.0
    %v1304 = vmin.f32 %v1272, 0.0
    %v1305 = vmin.f32 %v1273, 0.0
    %v1306 = vmin.f32 %v1274, 0.0
    %v1307 = vmin.f32 %v1275, 0.0
    %v1308 = vmin.f32 %v1276, 0.0
    %v1309 = vmin.f32 %v1277, 0.0
    %v1310 = vmin.f32 %v1278, 0.0
    %v1311 = vmin.f32 %v1279, 0.0
    %v1312 = vmin.f32 %v1280, 0.0
    %v1313 = vmin.f32 %v1281, 0.0
    %v1314 = vmin.f32 %v1282, 0.0
    %v1315 = vmin.f32 %v1283, 0.0
    %v1316 = vmin.f32 %v1284, 0.0
    %v1317 = vmul.f32 %v810, %v1301
    %v1318 = vmul.f32 %v810, %v1302
    %v1319 = vmul.f32 %v810, %v1303
    %v1320 = vmul.f32 %v810, %v1304
    %v1321 = vmul.f32 %v810, %v1305
    %v1322 = vmul.f32 %v810, %v1306
    %v1323 = vmul.f32 %v810, %v1307
    %v1324 = vmul.f32 %v810, %v1308
    %v1325 = vmul.f32 %v810, %v1309
    %v1326 = vmul.f32 %v810, %v1310
    %v1327 = vmul.f32 %v810, %v1311
    %v1328 = vmul.f32 %v810, %v1312
    %v1329 = vmul.f32 %v810, %v1313
    %v1330 = vmul.f32 %v810, %v1314
    %v1331 = vmul.f32 %v810, %v1315
    %v1332 = vmul.f32 %v810, %v1316
    %v1333 = vadd.f32 %v1285, %v1317
    %v1334 = vadd.f32 %v1286, %v1318
    %v1335 = vadd.f32 %v1287, %v1319
    %v1336 = vadd.f32 %v1288, %v1320
    %v1337 = vadd.f32 %v1289, %v1321
    %v1338 = vadd.f32 %v1290, %v1322
    %v1339 = vadd.f32 %v1291, %v1323
    %v1340 = vadd.f32 %v1292, %v1324
    %v1341 = vadd.f32 %v1293, %v1325
    %v1342 = vadd.f32 %v1294, %v1326
    %v1343 = vadd.f32 %v1295, %v1327
    %v1344 = vadd.f32 %v1296, %v1328
    %v1345 = vadd.f32 %v1297, %v1329
    %v1346 = vadd.f32 %v1298, %v1330
    %v1347 = vadd.f32 %v1299, %v1331
    %v1348 = vadd.f32 %v1300, %v1332
    %1349 = vst [vmem:[#allocation8] sm:$0xff] %v1333
    %1350 = vst [vmem:[#allocation8 + $0x8] sm:$0xff] %v1334
    %1351 = vst [vmem:[#allocation8 + $0x10] sm:$0xff] %v1335
    %1352 = vst [vmem:[#allocation8 + $0x18] sm:$0xff] %v1336
    %1353 = vst [vmem:[#allocation8 + $0x20] sm:$0xff] %v1337
    %1354 = vst [vmem:[#allocation8 + $0x28] sm:$0xff] %v1338
    %1355 = vst [vmem:[#allocation8 + $0x30] sm:$0xff] %v1339
    %1356 = vst [vmem:[#allocation8 + $0x38] sm:$0xff] %v1340
    %1357 = vst [vmem:[#allocation8 + $0x40] sm:$0xff] %v1341
    %1358 = vst [vmem:[#allocation8 + $0x48] sm:$0xff] %v1342
    %1359 = vst [vmem:[#allocation8 + $0x50] sm:$0xff] %v1343
    %1360 = vst [vmem:[#allocation8 + $0x58] sm:$0xff] %v1344
    %1361 = vst [vmem:[#allocation8 + $0x60] sm:$0xff] %v1345
    %1362 = vst [vmem:[#allocation8 + $0x68] sm:$0xff] %v1346
    %1363 = vst [vmem:[#allocation8 + $0x70] sm:$0xff] %v1347
    %1364 = vst [vmem:[#allocation8 + $0x78] sm:$0xff] %v1348
    // Predicated region
    $region46: #{tpu_custom_call.1} parent=1 // pred_check
      _
    $region47: #{tpu_custom_call.1} parent=1 // pred_check_branch
      %1366 = sbr.rel (0) target = $region49
    $region48: #{tpu_custom_call.1} parent=1 // pred_region
      %s1368 = ssub.s32 2048, 2048
      %1369 = vsyncadd [#allocation5], %s1368
      %s1370 = sshll.u32 [#allocation8], 4
      %s1371 = int_to_ptr.vmem [resolvable:$true] %s1370
      %1376 = dma.vmem_to_hbm [thread:$0]  %s1371, 2048, %s9, [#allocation5], 128, 128, 8
    $region49: #{tpu_custom_call.1} parent=1 // pred_fallthru
      _
    // Predicated region
    $region50: #{tpu_custom_call.1} parent=1 // pred_check
      _
    $region51: #{tpu_custom_call.1} parent=1 // pred_check_branch
      %1378 = sbr.rel (0) target = $region53
    $region52: #{tpu_custom_call.1} parent=1 // pred_region
      %1379 = dma.done [#allocation5], 2048
    $region53: #{tpu_custom_call.1} parent=1 // pred_fallthru
      _
    %1380 = vsyncpa [#allocation4], 1
    %1381 = vsyncpa [#allocation7], 1
    %1382 = vsyncpa [#allocation5], 1

</llo_original>
